<compile_context>
chip_gen: v5e
topology: v5e:2x2
jax: 0.10.0
libtpu: 0.0.40
codegen_flags: <defaults>
</compile_context>

<pallas_src>
import functools

import jax
import jax.numpy as jnp
import numpy as np
from jax import lax
from jax.experimental import pallas as pl
from jax.experimental.pallas import tpu as pltpu

LANE = 128            # TPU lane width: conv output channels padded to this.
TARGET_TM = 512       # target row tile (sublane axis); clamped for small M.
CAST_MATMUL_TO_BF16 = False   # optional v6e/v7x MXU speedup (looser accuracy)


def _round_up(x, m):
    return ((x + m - 1) // m) * m


def _row_tile(m):
    """Row tile (multiple of 8, <= TARGET_TM) and padded row count."""
    tm = min(TARGET_TM, _round_up(m, 8))
    return tm, _round_up(m, tm)


# ------------------------------------------------------------------ kernel ---
def _fused_conv_kernel(*refs, pre_affine, stats, act, tm, tap_c, m_valid):
    """act( [mish(x*s+t) * edge_mask] @ W + b )   (+ per-channel sum / sumsq)."""
    it = iter(refs)
    x_ref = next(it)                      # (tm, 3*tap_c) im2col rows
    w_ref = next(it)                      # (3*tap_c, Cp)  resident
    b_ref = next(it)                      # (1, Cp)        resident
    if pre_affine:
        lk_ref = next(it)                 # (tm, 1) keep left conv tap
        rk_ref = next(it)                 # (tm, 1) keep right conv tap
        s_ref = next(it)                  # (1, 3*tap_c) BN scale (tiled x3)
        t_ref = next(it)                  # (1, 3*tap_c) BN shift (tiled x3)
    o_ref = next(it)                      # (tm, Cp)
    if stats:
        sum_ref = next(it)                # (1, Cp) resident accumulator
        ssq_ref = next(it)                # (1, Cp) resident accumulator

    x = x_ref[...]
    if pre_affine:
        # Previous layer's BatchNorm affine + Mish, fused on the im2col input.
        a = x * s_ref[...] + t_ref[...]
        a = a * jnp.tanh(jax.nn.softplus(a))            # Mish
        # The reference net zero-pads the *activated* signal for the k=3 conv:
        # zero the left/right tap columns at sequence edges.
        col = lax.broadcasted_iota(jnp.int32, (1, 3 * tap_c), 1)
        lk = lk_ref[...]
        rk = rk_ref[...]
        x = a * jnp.where(col < tap_c, lk,
                          jnp.where(col >= 2 * tap_c, rk, 1.0))

    if CAST_MATMUL_TO_BF16:
        y = jnp.dot(x.astype(jnp.bfloat16), w_ref[...].astype(jnp.bfloat16),
                    preferred_element_type=jnp.float32)
    else:
        y = jnp.dot(x, w_ref[...], preferred_element_type=jnp.float32)
    y = y + b_ref[...]
    if act == "tanh":
        y = jnp.tanh(y)
    o_ref[...] = y

    if stats:
        # Single-pass BN statistics (sum / sum of squares) as a reduction
        # epilogue.  Row padding (if any) is masked so it never pollutes them.
        if m_valid % tm:
            rid = pl.program_id(0) * tm + lax.broadcasted_iota(
                jnp.int32, (tm, 1), 0)
            ym = jnp.where(rid < m_valid, y, 0.0)
        else:
            ym = y
        ts = jnp.sum(ym, axis=0, keepdims=True)
        tq = jnp.sum(ym * ym, axis=0, keepdims=True)

        @pl.when(pl.program_id(0) == 0)
        def _init():
            sum_ref[...] = jnp.zeros_like(sum_ref)
            ssq_ref[...] = jnp.zeros_like(ssq_ref)

        sum_ref[...] += ts
        ssq_ref[...] += tq


# --------------------------------------------------------------- wrappers ---
def _fused_conv(xm, w_mat, b_row, lk=None, rk=None, s_row=None, t_row=None, *,
                act="none", stats=False):
    """One Conv1d(k=3, p=1) layer as a Pallas matmul over im2col rows.

    xm: (M, K) im2col rows, K = 3 * Cin_padded;  w_mat: (K, Cp);  b_row: (1, Cp)
    lk/rk/s_row/t_row: fused previous-layer BN affine + Mish (optional).
    Returns [conv (Mp, Cp)] (+ [sum (1,Cp), sumsq (1,Cp)] when stats=True).
    """
    m, k = xm.shape
    cp = w_mat.shape[1]
    tm, mp = _row_tile(m)
    if mp != m:
        xm = jnp.pad(xm, ((0, mp - m), (0, 0)))
    pre_affine = s_row is not None

    inputs = [xm, w_mat, b_row]
    in_specs = [
        pl.BlockSpec((tm, k), lambda i: (i, 0)),
        pl.BlockSpec((k, cp), lambda i: (0, 0)),     # resident
        pl.BlockSpec((1, cp), lambda i: (0, 0)),     # resident
    ]
    if pre_affine:
        if lk.shape[0] != mp:
            lk = jnp.pad(lk, ((0, mp - lk.shape[0]), (0, 0)))
            rk = jnp.pad(rk, ((0, mp - rk.shape[0]), (0, 0)))
        inputs += [lk, rk, s_row, t_row]
        in_specs += [
            pl.BlockSpec((tm, 1), lambda i: (i, 0)),
            pl.BlockSpec((tm, 1), lambda i: (i, 0)),
            pl.BlockSpec((1, k), lambda i: (0, 0)),
            pl.BlockSpec((1, k), lambda i: (0, 0)),
        ]

    out_shape = [jax.ShapeDtypeStruct((mp, cp), jnp.float32)]
    out_specs = [pl.BlockSpec((tm, cp), lambda i: (i, 0))]
    if stats:
        out_shape += [jax.ShapeDtypeStruct((1, cp), jnp.float32)] * 2
        out_specs += [pl.BlockSpec((1, cp), lambda i: (0, 0)),
                      pl.BlockSpec((1, cp), lambda i: (0, 0))]

    kernel = functools.partial(
        _fused_conv_kernel, pre_affine=pre_affine, stats=stats, act=act,
        tm=tm, tap_c=k // 3, m_valid=m)

    return pl.pallas_call(
        kernel,
        out_shape=tuple(out_shape),
        grid=(mp // tm,),
        in_specs=in_specs,
        out_specs=out_specs,
        compiler_params=pltpu.CompilerParams(
            # Stats accumulate across the row axis -> "arbitrary"; the
            # stat-free final conv can shard across TensorCores (v7x).
            dimension_semantics=("arbitrary" if stats else "parallel",)),
    )(*inputs)


def _bn_scale_shift(ssum, ssq, count, gamma_p, beta_p, eps=1e-5):
    """Training-mode BN folded into per-channel scale s and shift t."""
    mean = ssum / count
    var = jnp.maximum(ssq / count - mean * mean, 0.0)    # biased variance
    s = gamma_p.reshape(1, -1) * lax.rsqrt(var + eps)
    t = beta_p.reshape(1, -1) - mean * s
    return s, t


def _edge_keep_masks(n, l):
    """(N*L, 1) masks killing the left tap at pos==0 / right tap at pos==L-1."""
    pos = jnp.arange(l, dtype=jnp.int32)
    lk = jnp.tile((pos != 0).astype(jnp.float32).reshape(l, 1), (n, 1))
    rk = jnp.tile((pos != l - 1).astype(jnp.float32).reshape(l, 1), (n, 1))
    return lk, rk


def _im2col_k3(y):
    """(N, L, C) -> (N*L, 3*C) rows for a k=3, pad=1 conv (zero edge pad)."""
    n, l, c = y.shape
    yp = jnp.pad(y, ((0, 0), (1, 1), (0, 0)))
    cols = jnp.concatenate([yp[:, k:k + l, :] for k in range(3)], axis=-1)
    return cols.reshape(n * l, 3 * c)


def _pack_w(w, cout_pad, cin_pad=None):
    """PyTorch (Cout, Cin, 3) conv weight -> (3*Cin_pad, Cout_pad) matmul W."""
    cout, cin, _ = w.shape
    cin_p = cin if cin_pad is None else cin_pad
    wm = jnp.zeros((3, cin_p, cout_pad), jnp.float32)
    wm = wm.at[:, :cin, :cout].set(jnp.transpose(w.astype(jnp.float32), (2, 1, 0)))
    return wm.reshape(3 * cin_p, cout_pad)


def _pad_vec(v, cp):
    return jnp.pad(v.astype(jnp.float32), (0, cp - v.shape[0]))


def decoder_forward(x_ncl, params):
    """Decoder.forward: (N, Cin, L) -> (N, Cout, 2*L), float32."""
    n, cin, l = x_ncl.shape
    h = params["w1"].shape[0]
    h2 = params["w2"].shape[0]
    cout = params["w3"].shape[0]
    hp, h2p, coutp = (_round_up(c, LANE) for c in (h, h2, cout))
    x = x_ncl.astype(jnp.float32)

    # ---- Conv1d(Cin -> H) + BN1 statistics (fused reduction epilogue) ------
    xm1 = _im2col_k3(jnp.transpose(x, (0, 2, 1)))                  # (N*L, 3Cin)
    y1, sum1, ssq1 = _fused_conv(
        xm1, _pack_w(params["w1"], hp),
        _pad_vec(params["b1"], hp).reshape(1, hp), act="none", stats=True)
    y1 = y1[: n * l].reshape(n, l, hp)            # raw conv output (pre-BN)
    s1, t1 = _bn_scale_shift(sum1, ssq1, n * l,
                             _pad_vec(params["g1"], hp),
                             _pad_vec(params["be1"], hp))

    # ---- Upsample x2 (nearest) + Conv1d(H -> H/2) + BN2 stats --------------
    # BN1 affine + Mish run inside the conv kernel, so the upsample / im2col
    # below only shuffle the RAW conv-1 output (nearest upsample commutes with
    # elementwise ops); no activated intermediate ever hits HBM.
    l2 = 2 * l
    xm2 = _im2col_k3(jnp.repeat(y1, 2, axis=1))                    # (N*2L, 3Hp)
    lk2, rk2 = _edge_keep_masks(n, l2)
    y2, sum2, ssq2 = _fused_conv(
        xm2, _pack_w(params["w2"], h2p, cin_pad=hp),
        _pad_vec(params["b2"], h2p).reshape(1, h2p),
        lk=lk2, rk=rk2,
        s_row=jnp.tile(s1, (1, 3)), t_row=jnp.tile(t1, (1, 3)),
        act="none", stats=True)
    y2 = y2[: n * l2].reshape(n, l2, h2p)
    s2, t2 = _bn_scale_shift(sum2, ssq2, n * l2,
                             _pad_vec(params["g2"], h2p),
                             _pad_vec(params["be2"], h2p))

    # ---- Conv1d(H/2 -> Cout) + Tanh (BN2 affine + Mish fused as pre-act) ---
    xm3 = _im2col_k3(y2)                                           # (N*2L, 3H2p)
    outs = _fused_conv(
        xm3, _pack_w(params["w3"], coutp, cin_pad=h2p),
        _pad_vec(params["b3"], coutp).reshape(1, coutp),
        lk=lk2, rk=rk2,
        s_row=jnp.tile(s2, (1, 3)), t_row=jnp.tile(t2, (1, 3)),
        act="tanh", stats=False)
    y3 = outs[0][: n * l2, :cout].reshape(n, l2, cout)
    return jnp.transpose(y3, (0, 2, 1))                            # (N, Cout, 2L)


decoder_forward = jax.jit(decoder_forward)


# ------------------------------------------------------ pure-JAX reference ---
def _ref_conv1d(x, w, b):  # x: (N, C, L)
    y = lax.conv_general_dilated(
        x, w, window_strides=(1,), padding=[(1, 1)],
        dimension_numbers=("NCH", "OIH", "NCH"))
    return y + b[None, :, None]


def _ref_mish(x):
    return x * jnp.tanh(jax.nn.softplus(x))


def _ref_bn(x, g, be, eps=1e-5):  # train-mode batch stats, biased variance
    mean = jnp.mean(x, axis=(0, 2), keepdims=True)
    var = jnp.mean((x - mean) ** 2, axis=(0, 2), keepdims=True)
    return (x - mean) / jnp.sqrt(var + eps) * g[None, :, None] + be[None, :, None]


def _ref_decoder(x, p):
    x = x.astype(jnp.float32)
    y = _ref_conv1d(x, p["w1"], p["b1"])
    y = _ref_mish(_ref_bn(y, p["g1"], p["be1"]))
    y = jnp.repeat(y, 2, axis=2)
    y = _ref_conv1d(y, p["w2"], p["b2"])
    y = _ref_mish(_ref_bn(y, p["g2"], p["be2"]))
    y = _ref_conv1d(y, p["w3"], p["b3"])
    return jnp.tanh(y)


# ------------------------------------------------------------------- main ---
def init_params(key, in_feat_dim, out_feat_dim, hidden_dim):
    h, h2 = hidden_dim, hidden_dim // 2
    ks = jax.random.split(key, 10)
    return {
        "w1": 0.1 * jax.random.normal(ks[0], (h, in_feat_dim, 3), jnp.float32),
        "b1": 0.05 * jax.random.normal(ks[1], (h,), jnp.float32),
        "g1": 1.0 + 0.05 * jax.random.normal(ks[2], (h,), jnp.float32),
        "be1": 0.05 * jax.random.normal(ks[3], (h,), jnp.float32),
        "w2": 0.1 * jax.random.normal(ks[4], (h2, h, 3), jnp.float32),
        "b2": 0.05 * jax.random.normal(ks[5], (h2,), jnp.float32),
        "g2": 1.0 + 0.05 * jax.random.normal(ks[6], (h2,), jnp.float32),
        "be2": 0.05 * jax.random.normal(ks[7], (h2,), jnp.float32),
        "w3": 0.1 * jax.random.normal(ks[8], (out_feat_dim, h2, 3), jnp.float32),
        "b3": 0.05 * jax.random.normal(ks[9], (out_feat_dim,), jnp.float32),
    }


if __name__ == "__main__":
    # Config 1: aligned shapes.  Config 2: ragged shapes that exercise the
    # row-padding stats mask and the edge-tap masking at different offsets.
    for (N, Cin, L, Cout, H) in [(2, 8, 16, 4, 32), (3, 5, 11, 3, 32)]:
        key = jax.random.PRNGKey(0)
        k_x, k_p = jax.random.split(key)
        x = jax.random.normal(k_x, (N, Cin, L), jnp.float32)
        params = init_params(k_p, Cin, Cout, H)

        out = jax.block_until_ready(decoder_forward(x, params))
        assert out.shape == (N, Cout, 2 * L), out.shape

        ref = jax.block_until_ready(_ref_decoder(x, params))
        np.testing.assert_allclose(np.asarray(out), np.asarray(ref),
                                   rtol=1e-4, atol=1e-4)

    print("KERNEL_OK")
</pallas_src>

<mosaic_0001>
module attributes {stable_mosaic.version = 11 : i64} {
  func.func @_fused_conv_kernel(%arg0: i32, %arg1: memref<32x24xf32, #tpu.memory_space<vmem>>, %arg2: memref<24x128xf32, #tpu.memory_space<vmem>>, %arg3: memref<1x128xf32, #tpu.memory_space<vmem>>, %arg4: memref<32x128xf32, #tpu.memory_space<vmem>>, %arg5: memref<1x128xf32, #tpu.memory_space<vmem>>, %arg6: memref<1x128xf32, #tpu.memory_space<vmem>>) attributes {dimension_semantics = [#tpu.dimension_semantics<arbitrary>], iteration_bounds = array<i64: 1>, scalar_prefetch = 0 : i64, scratch_operands = 0 : i64, tpu.core_type = #tpu.core_type<tc>, window_params = [{transform_indices = @transform_0, window_bounds = array<i64: 32, 24>}, {pipeline_mode = #tpu.pipeline_mode<synchronous>, transform_indices = @transform_1, window_bounds = array<i64: 24, 128>}, {pipeline_mode = #tpu.pipeline_mode<synchronous>, transform_indices = @transform_2, window_bounds = array<i64: 1, 128>}, {transform_indices = @transform_3, window_bounds = array<i64: 32, 128>}, {pipeline_mode = #tpu.pipeline_mode<synchronous>, transform_indices = @transform_4, window_bounds = array<i64: 1, 128>}, {pipeline_mode = #tpu.pipeline_mode<synchronous>, transform_indices = @transform_5, window_bounds = array<i64: 1, 128>}]} {
    %c0 = arith.constant 0 : index
    %c0_0 = arith.constant 0 : index
    %0 = vector.load %arg1[%c0, %c0_0] : memref<32x24xf32, #tpu.memory_space<vmem>>, vector<32x24xf32>
    %c0_1 = arith.constant 0 : index
    %c0_2 = arith.constant 0 : index
    %1 = vector.load %arg2[%c0_1, %c0_2] : memref<24x128xf32, #tpu.memory_space<vmem>>, vector<24x128xf32>
    %cst = arith.constant dense<0.000000e+00> : vector<32x128xf32>
    %2 = tpu.matmul %0, %1, %cst {dimension_numbers = #tpu.dot_dimension_numbers<[1], [0], [0], [1], [0, 0, 1, 1], [], []>} : vector<32x24xf32>, vector<24x128xf32>, vector<32x128xf32> -> vector<32x128xf32>
    %c0_3 = arith.constant 0 : index
    %c0_4 = arith.constant 0 : index
    %3 = vector.load %arg3[%c0_3, %c0_4] : memref<1x128xf32, #tpu.memory_space<vmem>>, vector<1x128xf32>
    %4 = vector.broadcast %3 : vector<1x128xf32> to vector<32x128xf32>
    %5 = arith.addf %2, %4 : vector<32x128xf32>
    %c0_5 = arith.constant 0 : index
    %c0_6 = arith.constant 0 : index
    %6 = vector.load %arg4[%c0_5, %c0_6] : memref<32x128xf32, #tpu.memory_space<vmem>>, vector<32x128xf32>
    tpu.vector_store %arg4[%c0_5, %c0_6], %5 {strides = array<i32>} : memref<32x128xf32, #tpu.memory_space<vmem>>, vector<32x128xf32>,
    %cst_7 = arith.constant dense<0.000000e+00> : vector<128xf32>
    %7 = vector.multi_reduction <add>, %5, %cst_7 [0] : vector<32x128xf32> to vector<128xf32>
    %8 = vector.shape_cast %7 : vector<128xf32> to vector<1x128xf32>
    %9 = arith.mulf %5, %5 : vector<32x128xf32>
    %cst_8 = arith.constant dense<0.000000e+00> : vector<128xf32>
    %10 = vector.multi_reduction <add>, %9, %cst_8 [0] : vector<32x128xf32> to vector<128xf32>
    %11 = vector.shape_cast %10 : vector<128xf32> to vector<1x128xf32>
    %c0_i32 = arith.constant 0 : i32
    %12 = arith.cmpi eq, %arg0, %c0_i32 : i32
    %13 = arith.extui %12 : i1 to i32
    %c0_i32_9 = arith.constant 0 : i32
    %14 = arith.cmpi ne, %13, %c0_i32_9 : i32
    scf.if %14 {
      %cst_18 = arith.constant 0.000000e+00 : f32
      %21 = vector.broadcast %cst_18 : f32 to vector<1x128xf32>
      %c0_19 = arith.constant 0 : index
      %c0_20 = arith.constant 0 : index
      %22 = vector.load %arg5[%c0_19, %c0_20] : memref<1x128xf32, #tpu.memory_space<vmem>>, vector<1x128xf32>
      tpu.vector_store %arg5[%c0_19, %c0_20], %21 {strides = array<i32>} : memref<1x128xf32, #tpu.memory_space<vmem>>, vector<1x128xf32>,
      %cst_21 = arith.constant 0.000000e+00 : f32
      %23 = vector.broadcast %cst_21 : f32 to vector<1x128xf32>
      %c0_22 = arith.constant 0 : index
      %c0_23 = arith.constant 0 : index
      %24 = vector.load %arg6[%c0_22, %c0_23] : memref<1x128xf32, #tpu.memory_space<vmem>>, vector<1x128xf32>
      tpu.vector_store %arg6[%c0_22, %c0_23], %23 {strides = array<i32>} : memref<1x128xf32, #tpu.memory_space<vmem>>, vector<1x128xf32>,
    } else {
    }
    %c0_10 = arith.constant 0 : index
    %c0_11 = arith.constant 0 : index
    %15 = vector.load %arg5[%c0_10, %c0_11] : memref<1x128xf32, #tpu.memory_space<vmem>>, vector<1x128xf32>
    %16 = arith.addf %15, %8 : vector<1x128xf32>
    %c0_12 = arith.constant 0 : index
    %c0_13 = arith.constant 0 : index
    %17 = vector.load %arg5[%c0_12, %c0_13] : memref<1x128xf32, #tpu.memory_space<vmem>>, vector<1x128xf32>
    tpu.vector_store %arg5[%c0_12, %c0_13], %16 {strides = array<i32>} : memref<1x128xf32, #tpu.memory_space<vmem>>, vector<1x128xf32>,
    %c0_14 = arith.constant 0 : index
    %c0_15 = arith.constant 0 : index
    %18 = vector.load %arg6[%c0_14, %c0_15] : memref<1x128xf32, #tpu.memory_space<vmem>>, vector<1x128xf32>
    %19 = arith.addf %18, %11 : vector<1x128xf32>
    %c0_16 = arith.constant 0 : index
    %c0_17 = arith.constant 0 : index
    %20 = vector.load %arg6[%c0_16, %c0_17] : memref<1x128xf32, #tpu.memory_space<vmem>>, vector<1x128xf32>
    tpu.vector_store %arg6[%c0_16, %c0_17], %19 {strides = array<i32>} : memref<1x128xf32, #tpu.memory_space<vmem>>, vector<1x128xf32>,
    return
  }
  func.func @transform_0(%arg0: i32) -> (i32, i32) {
    %c0_i32 = arith.constant 0 : i32
    %c0_i32_0 = arith.constant 0 : i32
    return %arg0, %c0_i32 : i32, i32
  }
  func.func @transform_1(%arg0: i32) -> (i32, i32) {
    %c0_i32 = arith.constant 0 : i32
    %c0_i32_0 = arith.constant 0 : i32
    %c0_i32_1 = arith.constant 0 : i32
    return %c0_i32, %c0_i32_0 : i32, i32
  }
  func.func @transform_2(%arg0: i32) -> (i32, i32) {
    %c0_i32 = arith.constant 0 : i32
    %c0_i32_0 = arith.constant 0 : i32
    %c0_i32_1 = arith.constant 0 : i32
    return %c0_i32, %c0_i32_0 : i32, i32
  }
  func.func @transform_3(%arg0: i32) -> (i32, i32) {
    %c0_i32 = arith.constant 0 : i32
    %c0_i32_0 = arith.constant 0 : i32
    return %arg0, %c0_i32 : i32, i32
  }
  func.func @transform_4(%arg0: i32) -> (i32, i32) {
    %c0_i32 = arith.constant 0 : i32
    %c0_i32_0 = arith.constant 0 : i32
    %c0_i32_1 = arith.constant 0 : i32
    return %c0_i32, %c0_i32_0 : i32, i32
  }
  func.func @transform_5(%arg0: i32) -> (i32, i32) {
    %c0_i32 = arith.constant 0 : i32
    %c0_i32_0 = arith.constant 0 : i32
    %c0_i32_1 = arith.constant 0 : i32
    return %c0_i32, %c0_i32_0 : i32, i32
  }
}

module attributes {stable_mosaic.version = 11 : i64} {
  func.func @_fused_conv_kernel(%arg0: i32, %arg1: memref<64x384xf32, #tpu.memory_space<vmem>>, %arg2: memref<384x128xf32, #tpu.memory_space<vmem>>, %arg3: memref<1x128xf32, #tpu.memory_space<vmem>>, %arg4: memref<64x1xf32, #tpu.memory_space<vmem>>, %arg5: memref<64x1xf32, #tpu.memory_space<vmem>>, %arg6: memref<1x384xf32, #tpu.memory_space<vmem>>, %arg7: memref<1x384xf32, #tpu.memory_space<vmem>>, %arg8: memref<64x128xf32, #tpu.memory_space<vmem>>, %arg9: memref<1x128xf32, #tpu.memory_space<vmem>>, %arg10: memref<1x128xf32, #tpu.memory_space<vmem>>) attributes {dimension_semantics = [#tpu.dimension_semantics<arbitrary>], iteration_bounds = array<i64: 1>, scalar_prefetch = 0 : i64, scratch_operands = 0 : i64, tpu.core_type = #tpu.core_type<tc>, window_params = [{transform_indices = @transform_0, window_bounds = array<i64: 64, 384>}, {pipeline_mode = #tpu.pipeline_mode<synchronous>, transform_indices = @transform_1, window_bounds = array<i64: 384, 128>}, {pipeline_mode = #tpu.pipeline_mode<synchronous>, transform_indices = @transform_2, window_bounds = array<i64: 1, 128>}, {transform_indices = @transform_3, window_bounds = array<i64: 64, 1>}, {transform_indices = @transform_4, window_bounds = array<i64: 64, 1>}, {pipeline_mode = #tpu.pipeline_mode<synchronous>, transform_indices = @transform_5, window_bounds = array<i64: 1, 384>}, {pipeline_mode = #tpu.pipeline_mode<synchronous>, transform_indices = @transform_6, window_bounds = array<i64: 1, 384>}, {transform_indices = @transform_7, window_bounds = array<i64: 64, 128>}, {pipeline_mode = #tpu.pipeline_mode<synchronous>, transform_indices = @transform_8, window_bounds = array<i64: 1, 128>}, {pipeline_mode = #tpu.pipeline_mode<synchronous>, transform_indices = @transform_9, window_bounds = array<i64: 1, 128>}]} {
    %c0 = arith.constant 0 : index
    %c0_0 = arith.constant 0 : index
    %0 = vector.load %arg1[%c0, %c0_0] : memref<64x384xf32, #tpu.memory_space<vmem>>, vector<64x384xf32>
    %c0_1 = arith.constant 0 : index
    %c0_2 = arith.constant 0 : index
    %1 = vector.load %arg6[%c0_1, %c0_2] : memref<1x384xf32, #tpu.memory_space<vmem>>, vector<1x384xf32>
    %2 = vector.broadcast %1 : vector<1x384xf32> to vector<64x384xf32>
    %3 = arith.mulf %0, %2 : vector<64x384xf32>
    %c0_3 = arith.constant 0 : index
    %c0_4 = arith.constant 0 : index
    %4 = vector.load %arg7[%c0_3, %c0_4] : memref<1x384xf32, #tpu.memory_space<vmem>>, vector<1x384xf32>
    %5 = vector.broadcast %4 : vector<1x384xf32> to vector<64x384xf32>
    %6 = arith.addf %3, %5 : vector<64x384xf32>
    %cst = arith.constant 0.000000e+00 : f32
    %7 = vector.broadcast %cst : f32 to vector<64x384xf32>
    %8 = arith.maximumf %6, %7 : vector<64x384xf32>
    %9 = vector.broadcast %cst : f32 to vector<64x384xf32>
    %10 = arith.subf %6, %9 : vector<64x384xf32>
    %11 = arith.cmpf one, %10, %10 : vector<64x384xf32>
    %12 = vector.broadcast %cst : f32 to vector<64x384xf32>
    %13 = arith.addf %6, %12 : vector<64x384xf32>
    %14 = math.absf %10 : vector<64x384xf32>
    %cst_5 = arith.constant 0.000000e+00 : f32
    %15 = vector.broadcast %cst_5 : f32 to vector<64x384xf32>
    %16 = arith.subf %15, %14 : vector<64x384xf32>
    %17 = math.exp %16 : vector<64x384xf32>
    %18 = math.log1p %17 : vector<64x384xf32>
    %19 = arith.addf %8, %18 : vector<64x384xf32>
    %20 = arith.select %11, %13, %19 : vector<64x384xi1>, vector<64x384xf32>
    %21 = math.tanh %20 : vector<64x384xf32>
    %22 = arith.mulf %6, %21 : vector<64x384xf32>
    %23 = tpu.iota {dimensions = array<i32: 1>} : vector<1x384xi32>
    %c0_6 = arith.constant 0 : index
    %c0_7 = arith.constant 0 : index
    %24 = vector.load %arg4[%c0_6, %c0_7] : memref<64x1xf32, #tpu.memory_space<vmem>>, vector<64x1xf32>
    %c0_8 = arith.constant 0 : index
    %c0_9 = arith.constant 0 : index
    %25 = vector.load %arg5[%c0_8, %c0_9] : memref<64x1xf32, #tpu.memory_space<vmem>>, vector<64x1xf32>
    %c128_i32 = arith.constant 128 : i32
    %26 = vector.broadcast %c128_i32 : i32 to vector<1x384xi32>
    %27 = arith.cmpi slt, %23, %26 : vector<1x384xi32>
    %c256_i32 = arith.constant 256 : i32
    %28 = vector.broadcast %c256_i32 : i32 to vector<1x384xi32>
    %29 = arith.cmpi sge, %23, %28 : vector<1x384xi32>
    %cst_10 = arith.constant 1.000000e+00 : f32
    %30 = vector.shape_cast %29 : vector<1x384xi1> to vector<1x384xi1>
    %31 = vector.broadcast %30 : vector<1x384xi1> to vector<64x384xi1>
    %32 = vector.shape_cast %25 : vector<64x1xf32> to vector<64x1xf32>
    %33 = vector.broadcast %32 : vector<64x1xf32> to vector<64x384xf32>
    %34 = vector.broadcast %cst_10 : f32 to vector<64x384xf32>
    %35 = arith.select %31, %33, %34 : vector<64x384xi1>, vector<64x384xf32>
    %36 = vector.shape_cast %27 : vector<1x384xi1> to vector<1x384xi1>
    %37 = vector.broadcast %36 : vector<1x384xi1> to vector<64x384xi1>
    %38 = vector.shape_cast %24 : vector<64x1xf32> to vector<64x1xf32>
    %39 = vector.broadcast %38 : vector<64x1xf32> to vector<64x384xf32>
    %40 = arith.select %37, %39, %35 : vector<64x384xi1>, vector<64x384xf32>
    %41 = arith.mulf %22, %40 : vector<64x384xf32>
    %c0_11 = arith.constant 0 : index
    %c0_12 = arith.constant 0 : index
    %42 = vector.load %arg2[%c0_11, %c0_12] : memref<384x128xf32, #tpu.memory_space<vmem>>, vector<384x128xf32>
    %cst_13 = arith.constant dense<0.000000e+00> : vector<64x128xf32>
    %43 = tpu.matmul %41, %42, %cst_13 {dimension_numbers = #tpu.dot_dimension_numbers<[1], [0], [0], [1], [0, 0, 1, 1], [], []>} : vector<64x384xf32>, vector<384x128xf32>, vector<64x128xf32> -> vector<64x128xf32>
    %c0_14 = arith.constant 0 : index
    %c0_15 = arith.constant 0 : index
    %44 = vector.load %arg3[%c0_14, %c0_15] : memref<1x128xf32, #tpu.memory_space<vmem>>, vector<1x128xf32>
    %45 = vector.broadcast %44 : vector<1x128xf32> to vector<64x128xf32>
    %46 = arith.addf %43, %45 : vector<64x128xf32>
    %c0_16 = arith.constant 0 : index
    %c0_17 = arith.constant 0 : index
    %47 = vector.load %arg8[%c0_16, %c0_17] : memref<64x128xf32, #tpu.memory_space<vmem>>, vector<64x128xf32>
    tpu.vector_store %arg8[%c0_16, %c0_17], %46 {strides = array<i32>} : memref<64x128xf32, #tpu.memory_space<vmem>>, vector<64x128xf32>,
    %cst_18 = arith.constant dense<0.000000e+00> : vector<128xf32>
    %48 = vector.multi_reduction <add>, %46, %cst_18 [0] : vector<64x128xf32> to vector<128xf32>
    %49 = vector.shape_cast %48 : vector<128xf32> to vector<1x128xf32>
    %50 = arith.mulf %46, %46 : vector<64x128xf32>
    %cst_19 = arith.constant dense<0.000000e+00> : vector<128xf32>
    %51 = vector.multi_reduction <add>, %50, %cst_19 [0] : vector<64x128xf32> to vector<128xf32>
    %52 = vector.shape_cast %51 : vector<128xf32> to vector<1x128xf32>
    %c0_i32 = arith.constant 0 : i32
    %53 = arith.cmpi eq, %arg0, %c0_i32 : i32
    %54 = arith.extui %53 : i1 to i32
    %c0_i32_20 = arith.constant 0 : i32
    %55 = arith.cmpi ne, %54, %c0_i32_20 : i32
    scf.if %55 {
      %cst_29 = arith.constant 0.000000e+00 : f32
      %62 = vector.broadcast %cst_29 : f32 to vector<1x128xf32>
      %c0_30 = arith.constant 0 : index
      %c0_31 = arith.constant 0 : index
      %63 = vector.load %arg9[%c0_30, %c0_31] : memref<1x128xf32, #tpu.memory_space<vmem>>, vector<1x128xf32>
      tpu.vector_store %arg9[%c0_30, %c0_31], %62 {strides = array<i32>} : memref<1x128xf32, #tpu.memory_space<vmem>>, vector<1x128xf32>,
      %cst_32 = arith.constant 0.000000e+00 : f32
      %64 = vector.broadcast %cst_32 : f32 to vector<1x128xf32>
      %c0_33 = arith.constant 0 : index
      %c0_34 = arith.constant 0 : index
      %65 = vector.load %arg10[%c0_33, %c0_34] : memref<1x128xf32, #tpu.memory_space<vmem>>, vector<1x128xf32>
      tpu.vector_store %arg10[%c0_33, %c0_34], %64 {strides = array<i32>} : memref<1x128xf32, #tpu.memory_space<vmem>>, vector<1x128xf32>,
    } else {
    }
    %c0_21 = arith.constant 0 : index
    %c0_22 = arith.constant 0 : index
    %56 = vector.load %arg9[%c0_21, %c0_22] : memref<1x128xf32, #tpu.memory_space<vmem>>, vector<1x128xf32>
    %57 = arith.addf %56, %49 : vector<1x128xf32>
    %c0_23 = arith.constant 0 : index
    %c0_24 = arith.constant 0 : index
    %58 = vector.load %arg9[%c0_23, %c0_24] : memref<1x128xf32, #tpu.memory_space<vmem>>, vector<1x128xf32>
    tpu.vector_store %arg9[%c0_23, %c0_24], %57 {strides = array<i32>} : memref<1x128xf32, #tpu.memory_space<vmem>>, vector<1x128xf32>,
    %c0_25 = arith.constant 0 : index
    %c0_26 = arith.constant 0 : index
    %59 = vector.load %arg10[%c0_25, %c0_26] : memref<1x128xf32, #tpu.memory_space<vmem>>, vector<1x128xf32>
    %60 = arith.addf %59, %52 : vector<1x128xf32>
    %c0_27 = arith.constant 0 : index
    %c0_28 = arith.constant 0 : index
    %61 = vector.load %arg10[%c0_27, %c0_28] : memref<1x128xf32, #tpu.memory_space<vmem>>, vector<1x128xf32>
    tpu.vector_store %arg10[%c0_27, %c0_28], %60 {strides = array<i32>} : memref<1x128xf32, #tpu.memory_space<vmem>>, vector<1x128xf32>,
    return
  }
  func.func @transform_0(%arg0: i32) -> (i32, i32) {
    %c0_i32 = arith.constant 0 : i32
    %c0_i32_0 = arith.constant 0 : i32
    return %arg0, %c0_i32 : i32, i32
  }
  func.func @transform_1(%arg0: i32) -> (i32, i32) {
    %c0_i32 = arith.constant 0 : i32
    %c0_i32_0 = arith.constant 0 : i32
    %c0_i32_1 = arith.constant 0 : i32
    return %c0_i32, %c0_i32_0 : i32, i32
  }
  func.func @transform_2(%arg0: i32) -> (i32, i32) {
    %c0_i32 = arith.constant 0 : i32
    %c0_i32_0 = arith.constant 0 : i32
    %c0_i32_1 = arith.constant 0 : i32
    return %c0_i32, %c0_i32_0 : i32, i32
  }
  func.func @transform_3(%arg0: i32) -> (i32, i32) {
    %c0_i32 = arith.constant 0 : i32
    %c0_i32_0 = arith.constant 0 : i32
    return %arg0, %c0_i32 : i32, i32
  }
  func.func @transform_4(%arg0: i32) -> (i32, i32) {
    %c0_i32 = arith.constant 0 : i32
    %c0_i32_0 = arith.constant 0 : i32
    return %arg0, %c0_i32 : i32, i32
  }
  func.func @transform_5(%arg0: i32) -> (i32, i32) {
    %c0_i32 = arith.constant 0 : i32
    %c0_i32_0 = arith.constant 0 : i32
    %c0_i32_1 = arith.constant 0 : i32
    return %c0_i32, %c0_i32_0 : i32, i32
  }
  func.func @transform_6(%arg0: i32) -> (i32, i32) {
    %c0_i32 = arith.constant 0 : i32
    %c0_i32_0 = arith.constant 0 : i32
    %c0_i32_1 = arith.constant 0 : i32
    return %c0_i32, %c0_i32_0 : i32, i32
  }
  func.func @transform_7(%arg0: i32) -> (i32, i32) {
    %c0_i32 = arith.constant 0 : i32
    %c0_i32_0 = arith.constant 0 : i32
    return %arg0, %c0_i32 : i32, i32
  }
  func.func @transform_8(%arg0: i32) -> (i32, i32) {
    %c0_i32 = arith.constant 0 : i32
    %c0_i32_0 = arith.constant 0 : i32
    %c0_i32_1 = arith.constant 0 : i32
    return %c0_i32, %c0_i32_0 : i32, i32
  }
  func.func @transform_9(%arg0: i32) -> (i32, i32) {
    %c0_i32 = arith.constant 0 : i32
    %c0_i32_0 = arith.constant 0 : i32
    %c0_i32_1 = arith.constant 0 : i32
    return %c0_i32, %c0_i32_0 : i32, i32
  }
}

module attributes {stable_mosaic.version = 11 : i64} {
  func.func @_fused_conv_kernel(%arg0: i32, %arg1: memref<64x384xf32, #tpu.memory_space<vmem>>, %arg2: memref<384x128xf32, #tpu.memory_space<vmem>>, %arg3: memref<1x128xf32, #tpu.memory_space<vmem>>, %arg4: memref<64x1xf32, #tpu.memory_space<vmem>>, %arg5: memref<64x1xf32, #tpu.memory_space<vmem>>, %arg6: memref<1x384xf32, #tpu.memory_space<vmem>>, %arg7: memref<1x384xf32, #tpu.memory_space<vmem>>, %arg8: memref<64x128xf32, #tpu.memory_space<vmem>>) attributes {dimension_semantics = [#tpu.dimension_semantics<parallel>], iteration_bounds = array<i64: 1>, scalar_prefetch = 0 : i64, scratch_operands = 0 : i64, tpu.core_type = #tpu.core_type<tc>, window_params = [{transform_indices = @transform_0, window_bounds = array<i64: 64, 384>}, {pipeline_mode = #tpu.pipeline_mode<synchronous>, transform_indices = @transform_1, window_bounds = array<i64: 384, 128>}, {pipeline_mode = #tpu.pipeline_mode<synchronous>, transform_indices = @transform_2, window_bounds = array<i64: 1, 128>}, {transform_indices = @transform_3, window_bounds = array<i64: 64, 1>}, {transform_indices = @transform_4, window_bounds = array<i64: 64, 1>}, {pipeline_mode = #tpu.pipeline_mode<synchronous>, transform_indices = @transform_5, window_bounds = array<i64: 1, 384>}, {pipeline_mode = #tpu.pipeline_mode<synchronous>, transform_indices = @transform_6, window_bounds = array<i64: 1, 384>}, {transform_indices = @transform_7, window_bounds = array<i64: 64, 128>}]} {
    %c0 = arith.constant 0 : index
    %c0_0 = arith.constant 0 : index
    %0 = vector.load %arg1[%c0, %c0_0] : memref<64x384xf32, #tpu.memory_space<vmem>>, vector<64x384xf32>
    %c0_1 = arith.constant 0 : index
    %c0_2 = arith.constant 0 : index
    %1 = vector.load %arg6[%c0_1, %c0_2] : memref<1x384xf32, #tpu.memory_space<vmem>>, vector<1x384xf32>
    %2 = vector.broadcast %1 : vector<1x384xf32> to vector<64x384xf32>
    %3 = arith.mulf %0, %2 : vector<64x384xf32>
    %c0_3 = arith.constant 0 : index
    %c0_4 = arith.constant 0 : index
    %4 = vector.load %arg7[%c0_3, %c0_4] : memref<1x384xf32, #tpu.memory_space<vmem>>, vector<1x384xf32>
    %5 = vector.broadcast %4 : vector<1x384xf32> to vector<64x384xf32>
    %6 = arith.addf %3, %5 : vector<64x384xf32>
    %cst = arith.constant 0.000000e+00 : f32
    %7 = vector.broadcast %cst : f32 to vector<64x384xf32>
    %8 = arith.maximumf %6, %7 : vector<64x384xf32>
    %9 = vector.broadcast %cst : f32 to vector<64x384xf32>
    %10 = arith.subf %6, %9 : vector<64x384xf32>
    %11 = arith.cmpf one, %10, %10 : vector<64x384xf32>
    %12 = vector.broadcast %cst : f32 to vector<64x384xf32>
    %13 = arith.addf %6, %12 : vector<64x384xf32>
    %14 = math.absf %10 : vector<64x384xf32>
    %cst_5 = arith.constant 0.000000e+00 : f32
    %15 = vector.broadcast %cst_5 : f32 to vector<64x384xf32>
    %16 = arith.subf %15, %14 : vector<64x384xf32>
    %17 = math.exp %16 : vector<64x384xf32>
    %18 = math.log1p %17 : vector<64x384xf32>
    %19 = arith.addf %8, %18 : vector<64x384xf32>
    %20 = arith.select %11, %13, %19 : vector<64x384xi1>, vector<64x384xf32>
    %21 = math.tanh %20 : vector<64x384xf32>
    %22 = arith.mulf %6, %21 : vector<64x384xf32>
    %23 = tpu.iota {dimensions = array<i32: 1>} : vector<1x384xi32>
    %c0_6 = arith.constant 0 : index
    %c0_7 = arith.constant 0 : index
    %24 = vector.load %arg4[%c0_6, %c0_7] : memref<64x1xf32, #tpu.memory_space<vmem>>, vector<64x1xf32>
    %c0_8 = arith.constant 0 : index
    %c0_9 = arith.constant 0 : index
    %25 = vector.load %arg5[%c0_8, %c0_9] : memref<64x1xf32, #tpu.memory_space<vmem>>, vector<64x1xf32>
    %c128_i32 = arith.constant 128 : i32
    %26 = vector.broadcast %c128_i32 : i32 to vector<1x384xi32>
    %27 = arith.cmpi slt, %23, %26 : vector<1x384xi32>
    %c256_i32 = arith.constant 256 : i32
    %28 = vector.broadcast %c256_i32 : i32 to vector<1x384xi32>
    %29 = arith.cmpi sge, %23, %28 : vector<1x384xi32>
    %cst_10 = arith.constant 1.000000e+00 : f32
    %30 = vector.shape_cast %29 : vector<1x384xi1> to vector<1x384xi1>
    %31 = vector.broadcast %30 : vector<1x384xi1> to vector<64x384xi1>
    %32 = vector.shape_cast %25 : vector<64x1xf32> to vector<64x1xf32>
    %33 = vector.broadcast %32 : vector<64x1xf32> to vector<64x384xf32>
    %34 = vector.broadcast %cst_10 : f32 to vector<64x384xf32>
    %35 = arith.select %31, %33, %34 : vector<64x384xi1>, vector<64x384xf32>
    %36 = vector.shape_cast %27 : vector<1x384xi1> to vector<1x384xi1>
    %37 = vector.broadcast %36 : vector<1x384xi1> to vector<64x384xi1>
    %38 = vector.shape_cast %24 : vector<64x1xf32> to vector<64x1xf32>
    %39 = vector.broadcast %38 : vector<64x1xf32> to vector<64x384xf32>
    %40 = arith.select %37, %39, %35 : vector<64x384xi1>, vector<64x384xf32>
    %41 = arith.mulf %22, %40 : vector<64x384xf32>
    %c0_11 = arith.constant 0 : index
    %c0_12 = arith.constant 0 : index
    %42 = vector.load %arg2[%c0_11, %c0_12] : memref<384x128xf32, #tpu.memory_space<vmem>>, vector<384x128xf32>
    %cst_13 = arith.constant dense<0.000000e+00> : vector<64x128xf32>
    %43 = tpu.matmul %41, %42, %cst_13 {dimension_numbers = #tpu.dot_dimension_numbers<[1], [0], [0], [1], [0, 0, 1, 1], [], []>} : vector<64x384xf32>, vector<384x128xf32>, vector<64x128xf32> -> vector<64x128xf32>
    %c0_14 = arith.constant 0 : index
    %c0_15 = arith.constant 0 : index
    %44 = vector.load %arg3[%c0_14, %c0_15] : memref<1x128xf32, #tpu.memory_space<vmem>>, vector<1x128xf32>
    %45 = vector.broadcast %44 : vector<1x128xf32> to vector<64x128xf32>
    %46 = arith.addf %43, %45 : vector<64x128xf32>
    %47 = math.tanh %46 : vector<64x128xf32>
    %c0_16 = arith.constant 0 : index
    %c0_17 = arith.constant 0 : index
    %48 = vector.load %arg8[%c0_16, %c0_17] : memref<64x128xf32, #tpu.memory_space<vmem>>, vector<64x128xf32>
    tpu.vector_store %arg8[%c0_16, %c0_17], %47 {strides = array<i32>} : memref<64x128xf32, #tpu.memory_space<vmem>>, vector<64x128xf32>,
    return
  }
  func.func @transform_0(%arg0: i32) -> (i32, i32) {
    %c0_i32 = arith.constant 0 : i32
    %c0_i32_0 = arith.constant 0 : i32
    return %arg0, %c0_i32 : i32, i32
  }
  func.func @transform_1(%arg0: i32) -> (i32, i32) {
    %c0_i32 = arith.constant 0 : i32
    %c0_i32_0 = arith.constant 0 : i32
    %c0_i32_1 = arith.constant 0 : i32
    return %c0_i32, %c0_i32_0 : i32, i32
  }
  func.func @transform_2(%arg0: i32) -> (i32, i32) {
    %c0_i32 = arith.constant 0 : i32
    %c0_i32_0 = arith.constant 0 : i32
    %c0_i32_1 = arith.constant 0 : i32
    return %c0_i32, %c0_i32_0 : i32, i32
  }
  func.func @transform_3(%arg0: i32) -> (i32, i32) {
    %c0_i32 = arith.constant 0 : i32
    %c0_i32_0 = arith.constant 0 : i32
    return %arg0, %c0_i32 : i32, i32
  }
  func.func @transform_4(%arg0: i32) -> (i32, i32) {
    %c0_i32 = arith.constant 0 : i32
    %c0_i32_0 = arith.constant 0 : i32
    return %arg0, %c0_i32 : i32, i32
  }
  func.func @transform_5(%arg0: i32) -> (i32, i32) {
    %c0_i32 = arith.constant 0 : i32
    %c0_i32_0 = arith.constant 0 : i32
    %c0_i32_1 = arith.constant 0 : i32
    return %c0_i32, %c0_i32_0 : i32, i32
  }
  func.func @transform_6(%arg0: i32) -> (i32, i32) {
    %c0_i32 = arith.constant 0 : i32
    %c0_i32_0 = arith.constant 0 : i32
    %c0_i32_1 = arith.constant 0 : i32
    return %c0_i32, %c0_i32_0 : i32, i32
  }
  func.func @transform_7(%arg0: i32) -> (i32, i32) {
    %c0_i32 = arith.constant 0 : i32
    %c0_i32_0 = arith.constant 0 : i32
    return %arg0, %c0_i32 : i32, i32
  }
}

</mosaic_0001>

<llo_original>
// kernel: decoder_forward.3
$region0: #{decoder_forward.3}
  #allocation0 [shape = 'u32[]', space=smem, size = 0x4, offset = 0x4, fixed_abs, tag = 'smem constant byte address 0x4 - core index']
  #allocation1 [shape = 'u32[72,128]{1,0:T(1,128)}', space=vmem, size = 0x9000, scoped, tag = 'internal scratch']
  %s0 = inlined_call_operand.vmem [shape: f32[32,24], index: 0, kind: input, shape index: {}]
  %s1 = inlined_call_operand.vmem [shape: f32[24,128], index: 1, kind: input, shape index: {}]
  %s2 = inlined_call_operand.vmem [shape: f32[1,128], index: 2, kind: input, shape index: {}]
  %s3 = inlined_call_operand.vmem [shape: f32[32,128], index: 3, kind: output, shape index: {0}]
  %s4 = inlined_call_operand.vmem [shape: f32[1,128], index: 4, kind: output, shape index: {1}]
  %s5 = inlined_call_operand.vmem [shape: f32[1,128], index: 5, kind: output, shape index: {2}]
  %6 = xla_tuple %s3, %s4, %s5
  %s7 = sld [smem:[#allocation0]]
  $region42: #{decoder_forward.3} parent=0
    _
  %s9 = ssub.s32 1, %s7
  %s10 = scalar_select 0, %s9, %s7
  // Predicated region
  $region2: #{decoder_forward.3} parent=0 // pred_check
    _
  $region3: #{decoder_forward.3} parent=0 // pred_check_branch
    %12 = sbr.rel (0) target = $region5
  $region4: #{decoder_forward.3} parent=0 // pred_region
    _
  $region5: #{decoder_forward.3} parent=0 // pred_fallthru
    _
  // Predicated region
  $region6: #{decoder_forward.3} parent=0 // pred_check
    _
  $region7: #{decoder_forward.3} parent=0 // pred_check_branch
    %14 = sbr.rel (0) target = $region9
  $region8: #{decoder_forward.3} parent=0 // pred_region
    _
  $region9: #{decoder_forward.3} parent=0 // pred_fallthru
    _
  // Predicated region
  $region10: #{decoder_forward.3} parent=0 // pred_check
    _
  $region11: #{decoder_forward.3} parent=0 // pred_check_branch
    %16 = sbr.rel (0) target = $region13
  $region12: #{decoder_forward.3} parent=0 // pred_region
    _
  $region13: #{decoder_forward.3} parent=0 // pred_fallthru
    _
  %v17 = vld [vmem:[%s0] sm:$0xff]
  %v18 = vld [vmem:[%s0 + $0x8] sm:$0xff]
  %v19 = vld [vmem:[%s0 + $0x10] sm:$0xff]
  %v20 = vld [vmem:[%s0 + $0x18] sm:$0xff]
  %v21 = vld [vmem:[%s1] sm:$0xff]
  %v22 = vld [vmem:[%s1 + $0x8] sm:$0xff]
  %v23 = vld [vmem:[%s1 + $0x10] sm:$0xff]
  %v24 = vld [vmem:[%s2] sm:$0x1]
  %v26 = vperm.slane %v24, 0
  %vm28 = vcmask 195584
  %v30 = vsel %vm28, %v17, 0
  %v33 = vsel %vm28, %v18, 0
  %v36 = vsel %vm28, %v19, 0
  %v39 = vsel %vm28, %v20, 0
  %41 = vmatpush.msra.mxu0 0.0
  %42 = vmatpush.msra.mxu0 0.0
  %43 = vmatpush.msra.mxu0 0.0
  %44 = vmatpush.msra.mxu0 0.0
  %45 = vmatpush.msra.mxu0 0.0
  %46 = vmatpush.msra.mxu0 0.0
  %47 = vmatpush.msra.mxu0 0.0
  %48 = vmatpush.msra.mxu0 0.0
  %49 = vmatpush.msra.mxu0 0.0
  %50 = vmatpush.msra.mxu0 0.0
  %51 = vmatpush.msra.mxu0 0.0
  %52 = vmatpush.msra.mxu0 0.0
  %53 = vmatpush.msra.mxu0 0.0
  %54 = vmatpush.msra.mxu0 %v23
  %55 = vmatpush.msra.mxu0 %v22
  %56 = vmatpush.msra.mxu0 %v21
  %57 = vmatmul.f32.gmra.mxu0 %v30
  %v58 = vpop.f32.mrf.mxu0
  %v59 = vadd.f32 %v26, %v58
  %60 = vmatmul.f32.gmra.mxu0 %v33
  %v61 = vpop.f32.mrf.mxu0
  %v62 = vadd.f32 %v26, %v61
  %63 = vmatmul.f32.gmra.mxu0 %v36
  %v64 = vpop.f32.mrf.mxu0
  %v65 = vadd.f32 %v26, %v64
  %66 = vmatmul.f32.gmra.mxu0 %v39
  %v67 = vpop.f32.mrf.mxu0
  %v68 = vadd.f32 %v26, %v67
  %69 = vdwg.mxu0
  %70 = vst [vmem:[%s3] sm:$0xff] %v59
  %71 = vst [vmem:[%s3 + $0x8] sm:$0xff] %v62
  %72 = vst [vmem:[%s3 + $0x10] sm:$0xff] %v65
  %73 = vst [vmem:[%s3 + $0x18] sm:$0xff] %v68
  %v74 = vadd.f32 %v59, %v62
  %v75 = vadd.f32 %v74, %v65
  %v76 = vadd.f32 %v75, %v68
  %v77 = vrot.slane %v76, 4
  %v78 = vadd.f32 %v76, %v77
  %v79 = vrot.slane %v78, 2
  %v80 = vadd.f32 %v78, %v79
  %v81 = vrot.slane %v80, 1
  %v82 = vadd.f32 %v80, %v81
  %v83 = vmul.f32 %v59, %v59
  %v84 = vmul.f32 %v62, %v62
  %v85 = vmul.f32 %v65, %v65
  %v86 = vmul.f32 %v68, %v68
  %v87 = vadd.f32 %v83, %v84
  %v88 = vadd.f32 %v87, %v85
  %v89 = vadd.f32 %v88, %v86
  %v90 = vrot.slane %v89, 4
  %v91 = vadd.f32 %v89, %v90
  %v92 = vrot.slane %v91, 2
  %v93 = vadd.f32 %v91, %v92
  %v94 = vrot.slane %v93, 1
  %v95 = vadd.f32 %v93, %v94
  %p96 = scmp.eq.s32.totalorder 0, 0
  // Predicated region
  $region14: #{decoder_forward.3} parent=0 // pred_check
    %p97 = pneg %p96
  $region15: #{decoder_forward.3} parent=0 // pred_check_branch
    %99 = sbr.rel (%p97) target = $region17
  $region16: #{decoder_forward.3} parent=0 // pred_region
    %100 = vst [vmem:[%s4] sm:$0x1] 0.0
    %101 = vst [vmem:[%s5] sm:$0x1] 0.0
  $region17: #{decoder_forward.3} parent=0 // pred_fallthru
    _
  %v102 = vld [vmem:[%s4] sm:$0x1]
  %v103 = vadd.f32 %v102, %v82
  %104 = vst [vmem:[%s4] sm:$0x1] %v103
  %v105 = vld [vmem:[%s5] sm:$0x1]
  %v106 = vadd.f32 %v105, %v95
  %107 = vst [vmem:[%s5] sm:$0x1] %v106
  // Predicated region
  $region18: #{decoder_forward.3} parent=0 // pred_check
    _
  $region19: #{decoder_forward.3} parent=0 // pred_check_branch
    %109 = sbr.rel (0) target = $region21
  $region20: #{decoder_forward.3} parent=0 // pred_region
    _
  $region21: #{decoder_forward.3} parent=0 // pred_fallthru
    _
  // Predicated region
  $region22: #{decoder_forward.3} parent=0 // pred_check
    _
  $region23: #{decoder_forward.3} parent=0 // pred_check_branch
    %111 = sbr.rel (0) target = $region25
  $region24: #{decoder_forward.3} parent=0 // pred_region
    _
  $region25: #{decoder_forward.3} parent=0 // pred_fallthru
    _
  // Predicated region
  $region26: #{decoder_forward.3} parent=0 // pred_check
    _
  $region27: #{decoder_forward.3} parent=0 // pred_check_branch
    %113 = sbr.rel (0) target = $region29
  $region28: #{decoder_forward.3} parent=0 // pred_region
    _
  $region29: #{decoder_forward.3} parent=0 // pred_fallthru
    _
  // Predicated region
  $region30: #{decoder_forward.3} parent=0 // pred_check
    _
  $region31: #{decoder_forward.3} parent=0 // pred_check_branch
    %115 = sbr.rel (0) target = $region33
  $region32: #{decoder_forward.3} parent=0 // pred_region
    _
  $region33: #{decoder_forward.3} parent=0 // pred_fallthru
    _
  // Predicated region
  $region34: #{decoder_forward.3} parent=0 // pred_check
    _
  $region35: #{decoder_forward.3} parent=0 // pred_check_branch
    %117 = sbr.rel (0) target = $region37
  $region36: #{decoder_forward.3} parent=0 // pred_region
    _
  $region37: #{decoder_forward.3} parent=0 // pred_fallthru
    _
  // Predicated region
  $region38: #{decoder_forward.3} parent=0 // pred_check
    _
  $region39: #{decoder_forward.3} parent=0 // pred_check_branch
    %119 = sbr.rel (0) target = $region41
  $region40: #{decoder_forward.3} parent=0 // pred_region
    _
  $region41: #{decoder_forward.3} parent=0 // pred_fallthru
    _

// kernel: decoder_forward.5
$region0: #{decoder_forward.5}
  #allocation0 [shape = 'u32[]', space=smem, size = 0x4, offset = 0x4, fixed_abs, tag = 'smem constant byte address 0x4 - core index']
  #allocation1 [shape = 'u32[72,128]{1,0:T(1,128)}', space=vmem, size = 0x9000, scoped, tag = 'internal scratch']
  %s0 = inlined_call_operand.vmem [shape: f32[64,384], index: 0, kind: input, shape index: {}]
  %s1 = inlined_call_operand.vmem [shape: f32[384,128], index: 1, kind: input, shape index: {}]
  %s2 = inlined_call_operand.vmem [shape: f32[1,128], index: 2, kind: input, shape index: {}]
  %s3 = inlined_call_operand.vmem [shape: f32[64,1], index: 3, kind: input, shape index: {}]
  %s4 = inlined_call_operand.vmem [shape: f32[64,1], index: 4, kind: input, shape index: {}]
  %s5 = inlined_call_operand.vmem [shape: f32[1,384], index: 5, kind: input, shape index: {}]
  %s6 = inlined_call_operand.vmem [shape: f32[1,384], index: 6, kind: input, shape index: {}]
  %s7 = inlined_call_operand.vmem [shape: f32[64,128], index: 7, kind: output, shape index: {}]
  %s8 = sld [smem:[#allocation0]]
  $region38: #{decoder_forward.5} parent=0
    _
  %s10 = ssub.s32 1, %s8
  %s11 = scalar_select 0, %s10, %s8
  // Predicated region
  $region2: #{decoder_forward.5} parent=0 // pred_check
    _
  $region3: #{decoder_forward.5} parent=0 // pred_check_branch
    %13 = sbr.rel (0) target = $region5
  $region4: #{decoder_forward.5} parent=0 // pred_region
    _
  $region5: #{decoder_forward.5} parent=0 // pred_fallthru
    _
  // Predicated region
  $region6: #{decoder_forward.5} parent=0 // pred_check
    _
  $region7: #{decoder_forward.5} parent=0 // pred_check_branch
    %15 = sbr.rel (0) target = $region9
  $region8: #{decoder_forward.5} parent=0 // pred_region
    _
  $region9: #{decoder_forward.5} parent=0 // pred_fallthru
    _
  // Predicated region
  $region10: #{decoder_forward.5} parent=0 // pred_check
    _
  $region11: #{decoder_forward.5} parent=0 // pred_check_branch
    %17 = sbr.rel (0) target = $region13
  $region12: #{decoder_forward.5} parent=0 // pred_region
    _
  $region13: #{decoder_forward.5} parent=0 // pred_fallthru
    _
  // Predicated region
  $region14: #{decoder_forward.5} parent=0 // pred_check
    _
  $region15: #{decoder_forward.5} parent=0 // pred_check_branch
    %19 = sbr.rel (0) target = $region17
  $region16: #{decoder_forward.5} parent=0 // pred_region
    _
  $region17: #{decoder_forward.5} parent=0 // pred_fallthru
    _
  // Predicated region
  $region18: #{decoder_forward.5} parent=0 // pred_check
    _
  $region19: #{decoder_forward.5} parent=0 // pred_check_branch
    %21 = sbr.rel (0) target = $region21
  $region20: #{decoder_forward.5} parent=0 // pred_region
    _
  $region21: #{decoder_forward.5} parent=0 // pred_fallthru
    _
  // Predicated region
  $region22: #{decoder_forward.5} parent=0 // pred_check
    _
  $region23: #{decoder_forward.5} parent=0 // pred_check_branch
    %23 = sbr.rel (0) target = $region25
  $region24: #{decoder_forward.5} parent=0 // pred_region
    _
  $region25: #{decoder_forward.5} parent=0 // pred_fallthru
    _
  // Predicated region
  $region26: #{decoder_forward.5} parent=0 // pred_check
    _
  $region27: #{decoder_forward.5} parent=0 // pred_check_branch
    %25 = sbr.rel (0) target = $region29
  $region28: #{decoder_forward.5} parent=0 // pred_region
    _
  $region29: #{decoder_forward.5} parent=0 // pred_fallthru
    _
  %v26 = vld [vmem:[%s0] sm:$0xff]
  %v27 = vld [vmem:[%s0 + $0x8] sm:$0xff]
  %v28 = vld [vmem:[%s0 + $0x10] sm:$0xff]
  %v29 = vld [vmem:[%s0 + $0x18] sm:$0xff]
  %v30 = vld [vmem:[%s0 + $0x20] sm:$0xff]
  %v31 = vld [vmem:[%s0 + $0x28] sm:$0xff]
  %v32 = vld [vmem:[%s0 + $0x30] sm:$0xff]
  %v33 = vld [vmem:[%s0 + $0x38] sm:$0xff]
  %v34 = vld [vmem:[%s0 + $0x40] sm:$0xff]
  %v35 = vld [vmem:[%s0 + $0x48] sm:$0xff]
  %v36 = vld [vmem:[%s0 + $0x50] sm:$0xff]
  %v37 = vld [vmem:[%s0 + $0x58] sm:$0xff]
  %v38 = vld [vmem:[%s0 + $0x60] sm:$0xff]
  %v39 = vld [vmem:[%s0 + $0x68] sm:$0xff]
  %v40 = vld [vmem:[%s0 + $0x70] sm:$0xff]
  %v41 = vld [vmem:[%s0 + $0x78] sm:$0xff]
  %v42 = vld [vmem:[%s0 + $0x80] sm:$0xff]
  %v43 = vld [vmem:[%s0 + $0x88] sm:$0xff]
  %v44 = vld [vmem:[%s0 + $0x90] sm:$0xff]
  %v45 = vld [vmem:[%s0 + $0x98] sm:$0xff]
  %v46 = vld [vmem:[%s0 + $0xa0] sm:$0xff]
  %v47 = vld [vmem:[%s0 + $0xa8] sm:$0xff]
  %v48 = vld [vmem:[%s0 + $0xb0] sm:$0xff]
  %v49 = vld [vmem:[%s0 + $0xb8] sm:$0xff]
  %v50 = vld [vmem:[%s5] sm:$0x7]
  %v52 = vperm.slane %v50, 0
  %v53 = vperm.slane %v50, 1
  %v54 = vperm.slane %v50, 2
  %v58 = vmul.f32 %v26, %v52
  %v59 = vmul.f32 %v27, %v53
  %v60 = vmul.f32 %v28, %v54
  %v61 = vmul.f32 %v29, %v52
  %v62 = vmul.f32 %v30, %v53
  %v63 = vmul.f32 %v31, %v54
  %v64 = vmul.f32 %v32, %v52
  %v65 = vmul.f32 %v33, %v53
  %v66 = vmul.f32 %v34, %v54
  %v67 = vmul.f32 %v35, %v52
  %v68 = vmul.f32 %v36, %v53
  %v69 = vmul.f32 %v37, %v54
  %v70 = vmul.f32 %v38, %v52
  %v71 = vmul.f32 %v39, %v53
  %v72 = vmul.f32 %v40, %v54
  %v73 = vmul.f32 %v41, %v52
  %v74 = vmul.f32 %v42, %v53
  %v75 = vmul.f32 %v43, %v54
  %v76 = vmul.f32 %v44, %v52
  %v77 = vmul.f32 %v45, %v53
  %v78 = vmul.f32 %v46, %v54
  %v79 = vmul.f32 %v47, %v52
  %v80 = vmul.f32 %v48, %v53
  %v81 = vmul.f32 %v49, %v54
  %v82 = vld [vmem:[%s6] sm:$0x7]
  %v84 = vperm.slane %v82, 0
  %v85 = vperm.slane %v82, 1
  %v86 = vperm.slane %v82, 2
  %v90 = vadd.f32 %v58, %v84
  %v91 = vadd.f32 %v59, %v85
  %v92 = vadd.f32 %v60, %v86
  %v93 = vadd.f32 %v61, %v84
  %v94 = vadd.f32 %v62, %v85
  %v95 = vadd.f32 %v63, %v86
  %v96 = vadd.f32 %v64, %v84
  %v97 = vadd.f32 %v65, %v85
  %v98 = vadd.f32 %v66, %v86
  %v99 = vadd.f32 %v67, %v84
  %v100 = vadd.f32 %v68, %v85
  %v101 = vadd.f32 %v69, %v86
  %v102 = vadd.f32 %v70, %v84
  %v103 = vadd.f32 %v71, %v85
  %v104 = vadd.f32 %v72, %v86
  %v105 = vadd.f32 %v73, %v84
  %v106 = vadd.f32 %v74, %v85
  %v107 = vadd.f32 %v75, %v86
  %v108 = vadd.f32 %v76, %v84
  %v109 = vadd.f32 %v77, %v85
  %v110 = vadd.f32 %v78, %v86
  %v111 = vadd.f32 %v79, %v84
  %v112 = vadd.f32 %v80, %v85
  %v113 = vadd.f32 %v81, %v86
  %v114 = vmax.f32 %v90, 0.0
  %v115 = vmax.f32 %v91, 0.0
  %v116 = vmax.f32 %v92, 0.0
  %v117 = vmax.f32 %v93, 0.0
  %v118 = vmax.f32 %v94, 0.0
  %v119 = vmax.f32 %v95, 0.0
  %v120 = vmax.f32 %v96, 0.0
  %v121 = vmax.f32 %v97, 0.0
  %v122 = vmax.f32 %v98, 0.0
  %v123 = vmax.f32 %v99, 0.0
  %v124 = vmax.f32 %v100, 0.0
  %v125 = vmax.f32 %v101, 0.0
  %v126 = vmax.f32 %v102, 0.0
  %v127 = vmax.f32 %v103, 0.0
  %v128 = vmax.f32 %v104, 0.0
  %v129 = vmax.f32 %v105, 0.0
  %v130 = vmax.f32 %v106, 0.0
  %v131 = vmax.f32 %v107, 0.0
  %v132 = vmax.f32 %v108, 0.0
  %v133 = vmax.f32 %v109, 0.0
  %v134 = vmax.f32 %v110, 0.0
  %v135 = vmax.f32 %v111, 0.0
  %v136 = vmax.f32 %v112, 0.0
  %v137 = vmax.f32 %v113, 0.0
  %vm138 = vcmp.ne.f32.partialorder %v90, %v90
  %vm139 = vcmp.ne.f32.partialorder %v91, %v91
  %vm140 = vcmp.ne.f32.partialorder %v92, %v92
  %vm141 = vcmp.ne.f32.partialorder %v93, %v93
  %vm142 = vcmp.ne.f32.partialorder %v94, %v94
  %vm143 = vcmp.ne.f32.partialorder %v95, %v95
  %vm144 = vcmp.ne.f32.partialorder %v96, %v96
  %vm145 = vcmp.ne.f32.partialorder %v97, %v97
  %vm146 = vcmp.ne.f32.partialorder %v98, %v98
  %vm147 = vcmp.ne.f32.partialorder %v99, %v99
  %vm148 = vcmp.ne.f32.partialorder %v100, %v100
  %vm149 = vcmp.ne.f32.partialorder %v101, %v101
  %vm150 = vcmp.ne.f32.partialorder %v102, %v102
  %vm151 = vcmp.ne.f32.partialorder %v103, %v103
  %vm152 = vcmp.ne.f32.partialorder %v104, %v104
  %vm153 = vcmp.ne.f32.partialorder %v105, %v105
  %vm154 = vcmp.ne.f32.partialorder %v106, %v106
  %vm155 = vcmp.ne.f32.partialorder %v107, %v107
  %vm156 = vcmp.ne.f32.partialorder %v108, %v108
  %vm157 = vcmp.ne.f32.partialorder %v109, %v109
  %vm158 = vcmp.ne.f32.partialorder %v110, %v110
  %vm159 = vcmp.ne.f32.partialorder %v111, %v111
  %vm160 = vcmp.ne.f32.partialorder %v112, %v112
  %vm161 = vcmp.ne.f32.partialorder %v113, %v113
  %v162 = vadd.f32 %v90, 0.0
  %v163 = vadd.f32 %v91, 0.0
  %v164 = vadd.f32 %v92, 0.0
  %v165 = vadd.f32 %v93, 0.0
  %v166 = vadd.f32 %v94, 0.0
  %v167 = vadd.f32 %v95, 0.0
  %v168 = vadd.f32 %v96, 0.0
  %v169 = vadd.f32 %v97, 0.0
  %v170 = vadd.f32 %v98, 0.0
  %v171 = vadd.f32 %v99, 0.0
  %v172 = vadd.f32 %v100, 0.0
  %v173 = vadd.f32 %v101, 0.0
  %v174 = vadd.f32 %v102, 0.0
  %v175 = vadd.f32 %v103, 0.0
  %v176 = vadd.f32 %v104, 0.0
  %v177 = vadd.f32 %v105, 0.0
  %v178 = vadd.f32 %v106, 0.0
  %v179 = vadd.f32 %v107, 0.0
  %v180 = vadd.f32 %v108, 0.0
  %v181 = vadd.f32 %v109, 0.0
  %v182 = vadd.f32 %v110, 0.0
  %v183 = vadd.f32 %v111, 0.0
  %v184 = vadd.f32 %v112, 0.0
  %v185 = vadd.f32 %v113, 0.0
  %v186 = vand.u32 2147483647, %v90
  %v187 = vand.u32 2147483647, %v91
  %v188 = vand.u32 2147483647, %v92
  %v189 = vand.u32 2147483647, %v93
  %v190 = vand.u32 2147483647, %v94
  %v191 = vand.u32 2147483647, %v95
  %v192 = vand.u32 2147483647, %v96
  %v193 = vand.u32 2147483647, %v97
  %v194 = vand.u32 2147483647, %v98
  %v195 = vand.u32 2147483647, %v99
  %v196 = vand.u32 2147483647, %v100
  %v197 = vand.u32 2147483647, %v101
  %v198 = vand.u32 2147483647, %v102
  %v199 = vand.u32 2147483647, %v103
  %v200 = vand.u32 2147483647, %v104
  %v201 = vand.u32 2147483647, %v105
  %v202 = vand.u32 2147483647, %v106
  %v203 = vand.u32 2147483647, %v107
  %v204 = vand.u32 2147483647, %v108
  %v205 = vand.u32 2147483647, %v109
  %v206 = vand.u32 2147483647, %v110
  %v207 = vand.u32 2147483647, %v111
  %v208 = vand.u32 2147483647, %v112
  %v209 = vand.u32 2147483647, %v113
  %v210 = vsub.f32 0.0, %v186
  %v211 = vsub.f32 0.0, %v187
  %v212 = vsub.f32 0.0, %v188
  %v213 = vsub.f32 0.0, %v189
  %v214 = vsub.f32 0.0, %v190
  %v215 = vsub.f32 0.0, %v191
  %v216 = vsub.f32 0.0, %v192
  %v217 = vsub.f32 0.0, %v193
  %v218 = vsub.f32 0.0, %v194
  %v219 = vsub.f32 0.0, %v195
  %v220 = vsub.f32 0.0, %v196
  %v221 = vsub.f32 0.0, %v197
  %v222 = vsub.f32 0.0, %v198
  %v223 = vsub.f32 0.0, %v199
  %v224 = vsub.f32 0.0, %v200
  %v225 = vsub.f32 0.0, %v201
  %v226 = vsub.f32 0.0, %v202
  %v227 = vsub.f32 0.0, %v203
  %v228 = vsub.f32 0.0, %v204
  %v229 = vsub.f32 0.0, %v205
  %v230 = vsub.f32 0.0, %v206
  %v231 = vsub.f32 0.0, %v207
  %v232 = vsub.f32 0.0, %v208
  %v233 = vsub.f32 0.0, %v209
  %v234 = vmul.f32 %v210, 1.442695
  %v235 = vpow.pop %v234
  %v236 = vmul.f32 %v211, 1.442695
  %v237 = vpow.pop %v236
  %v238 = vmul.f32 %v212, 1.442695
  %v239 = vpow.pop %v238
  %v240 = vmul.f32 %v213, 1.442695
  %v241 = vpow.pop %v240
  %v242 = vmul.f32 %v214, 1.442695
  %v243 = vpow.pop %v242
  %v244 = vmul.f32 %v215, 1.442695
  %v245 = vpow.pop %v244
  %v246 = vmul.f32 %v216, 1.442695
  %v247 = vpow.pop %v246
  %v248 = vmul.f32 %v217, 1.442695
  %v249 = vpow.pop %v248
  %v250 = vmul.f32 %v218, 1.442695
  %v251 = vpow.pop %v250
  %v252 = vmul.f32 %v219, 1.442695
  %v253 = vpow.pop %v252
  %v254 = vmul.f32 %v220, 1.442695
  %v255 = vpow.pop %v254
  %v256 = vmul.f32 %v221, 1.442695
  %v257 = vpow.pop %v256
  %v258 = vmul.f32 %v222, 1.442695
  %v259 = vpow.pop %v258
  %v260 = vmul.f32 %v223, 1.442695
  %v261 = vpow.pop %v260
  %v262 = vmul.f32 %v224, 1.442695
  %v263 = vpow.pop %v262
  %v264 = vmul.f32 %v225, 1.442695
  %v265 = vpow.pop %v264
  %v266 = vmul.f32 %v226, 1.442695
  %v267 = vpow.pop %v266
  %v268 = vmul.f32 %v227, 1.442695
  %v269 = vpow.pop %v268
  %v270 = vmul.f32 %v228, 1.442695
  %v271 = vpow.pop %v270
  %v272 = vmul.f32 %v229, 1.442695
  %v273 = vpow.pop %v272
  %v274 = vmul.f32 %v230, 1.442695
  %v275 = vpow.pop %v274
  %v276 = vmul.f32 %v231, 1.442695
  %v277 = vpow.pop %v276
  %v278 = vmul.f32 %v232, 1.442695
  %v279 = vpow.pop %v278
  %v280 = vmul.f32 %v233, 1.442695
  %v281 = vpow.pop %v280
  %v282 = vadd.f32 %v235, 1.0
  %v283 = vlog2.pop %v282
  %v284 = vmul.f32 %v283, 0.6931472
  %v285 = vmul.f32 -0.5, %v235
  %v286 = vadd.f32 %v285, 1.0
  %v287 = vmul.f32 %v286, %v235
  %v288 = vand.u32 2147483647, %v235
  %vm289 = vcmp.lt.f32.partialorder %v288, 0.0004427343
  %v290 = vsel %vm289, %v287, %v284
  %v291 = vadd.f32 %v237, 1.0
  %v292 = vlog2.pop %v291
  %v293 = vmul.f32 %v292, 0.6931472
  %v294 = vmul.f32 -0.5, %v237
  %v295 = vadd.f32 %v294, 1.0
  %v296 = vmul.f32 %v295, %v237
  %v297 = vand.u32 2147483647, %v237
  %vm298 = vcmp.lt.f32.partialorder %v297, 0.0004427343
  %v299 = vsel %vm298, %v296, %v293
  %v300 = vadd.f32 %v239, 1.0
  %v301 = vlog2.pop %v300
  %v302 = vmul.f32 %v301, 0.6931472
  %v303 = vmul.f32 -0.5, %v239
  %v304 = vadd.f32 %v303, 1.0
  %v305 = vmul.f32 %v304, %v239
  %v306 = vand.u32 2147483647, %v239
  %vm307 = vcmp.lt.f32.partialorder %v306, 0.0004427343
  %v308 = vsel %vm307, %v305, %v302
  %v309 = vadd.f32 %v241, 1.0
  %v310 = vlog2.pop %v309
  %v311 = vmul.f32 %v310, 0.6931472
  %v312 = vmul.f32 -0.5, %v241
  %v313 = vadd.f32 %v312, 1.0
  %v314 = vmul.f32 %v313, %v241
  %v315 = vand.u32 2147483647, %v241
  %vm316 = vcmp.lt.f32.partialorder %v315, 0.0004427343
  %v317 = vsel %vm316, %v314, %v311
  %v318 = vadd.f32 %v243, 1.0
  %v319 = vlog2.pop %v318
  %v320 = vmul.f32 %v319, 0.6931472
  %v321 = vmul.f32 -0.5, %v243
  %v322 = vadd.f32 %v321, 1.0
  %v323 = vmul.f32 %v322, %v243
  %v324 = vand.u32 2147483647, %v243
  %vm325 = vcmp.lt.f32.partialorder %v324, 0.0004427343
  %v326 = vsel %vm325, %v323, %v320
  %v327 = vadd.f32 %v245, 1.0
  %v328 = vlog2.pop %v327
  %v329 = vmul.f32 %v328, 0.6931472
  %v330 = vmul.f32 -0.5, %v245
  %v331 = vadd.f32 %v330, 1.0
  %v332 = vmul.f32 %v331, %v245
  %v333 = vand.u32 2147483647, %v245
  %vm334 = vcmp.lt.f32.partialorder %v333, 0.0004427343
  %v335 = vsel %vm334, %v332, %v329
  %v336 = vadd.f32 %v247, 1.0
  %v337 = vlog2.pop %v336
  %v338 = vmul.f32 %v337, 0.6931472
  %v339 = vmul.f32 -0.5, %v247
  %v340 = vadd.f32 %v339, 1.0
  %v341 = vmul.f32 %v340, %v247
  %v342 = vand.u32 2147483647, %v247
  %vm343 = vcmp.lt.f32.partialorder %v342, 0.0004427343
  %v344 = vsel %vm343, %v341, %v338
  %v345 = vadd.f32 %v249, 1.0
  %v346 = vlog2.pop %v345
  %v347 = vmul.f32 %v346, 0.6931472
  %v348 = vmul.f32 -0.5, %v249
  %v349 = vadd.f32 %v348, 1.0
  %v350 = vmul.f32 %v349, %v249
  %v351 = vand.u32 2147483647, %v249
  %vm352 = vcmp.lt.f32.partialorder %v351, 0.0004427343
  %v353 = vsel %vm352, %v350, %v347
  %v354 = vadd.f32 %v251, 1.0
  %v355 = vlog2.pop %v354
  %v356 = vmul.f32 %v355, 0.6931472
  %v357 = vmul.f32 -0.5, %v251
  %v358 = vadd.f32 %v357, 1.0
  %v359 = vmul.f32 %v358, %v251
  %v360 = vand.u32 2147483647, %v251
  %vm361 = vcmp.lt.f32.partialorder %v360, 0.0004427343
  %v362 = vsel %vm361, %v359, %v356
  %v363 = vadd.f32 %v253, 1.0
  %v364 = vlog2.pop %v363
  %v365 = vmul.f32 %v364, 0.6931472
  %v366 = vmul.f32 -0.5, %v253
  %v367 = vadd.f32 %v366, 1.0
  %v368 = vmul.f32 %v367, %v253
  %v369 = vand.u32 2147483647, %v253
  %vm370 = vcmp.lt.f32.partialorder %v369, 0.0004427343
  %v371 = vsel %vm370, %v368, %v365
  %v372 = vadd.f32 %v255, 1.0
  %v373 = vlog2.pop %v372
  %v374 = vmul.f32 %v373, 0.6931472
  %v375 = vmul.f32 -0.5, %v255
  %v376 = vadd.f32 %v375, 1.0
  %v377 = vmul.f32 %v376, %v255
  %v378 = vand.u32 2147483647, %v255
  %vm379 = vcmp.lt.f32.partialorder %v378, 0.0004427343
  %v380 = vsel %vm379, %v377, %v374
  %v381 = vadd.f32 %v257, 1.0
  %v382 = vlog2.pop %v381
  %v383 = vmul.f32 %v382, 0.6931472
  %v384 = vmul.f32 -0.5, %v257
  %v385 = vadd.f32 %v384, 1.0
  %v386 = vmul.f32 %v385, %v257
  %v387 = vand.u32 2147483647, %v257
  %vm388 = vcmp.lt.f32.partialorder %v387, 0.0004427343
  %v389 = vsel %vm388, %v386, %v383
  %v390 = vadd.f32 %v259, 1.0
  %v391 = vlog2.pop %v390
  %v392 = vmul.f32 %v391, 0.6931472
  %v393 = vmul.f32 -0.5, %v259
  %v394 = vadd.f32 %v393, 1.0
  %v395 = vmul.f32 %v394, %v259
  %v396 = vand.u32 2147483647, %v259
  %vm397 = vcmp.lt.f32.partialorder %v396, 0.0004427343
  %v398 = vsel %vm397, %v395, %v392
  %v399 = vadd.f32 %v261, 1.0
  %v400 = vlog2.pop %v399
  %v401 = vmul.f32 %v400, 0.6931472
  %v402 = vmul.f32 -0.5, %v261
  %v403 = vadd.f32 %v402, 1.0
  %v404 = vmul.f32 %v403, %v261
  %v405 = vand.u32 2147483647, %v261
  %vm406 = vcmp.lt.f32.partialorder %v405, 0.0004427343
  %v407 = vsel %vm406, %v404, %v401
  %v408 = vadd.f32 %v263, 1.0
  %v409 = vlog2.pop %v408
  %v410 = vmul.f32 %v409, 0.6931472
  %v411 = vmul.f32 -0.5, %v263
  %v412 = vadd.f32 %v411, 1.0
  %v413 = vmul.f32 %v412, %v263
  %v414 = vand.u32 2147483647, %v263
  %vm415 = vcmp.lt.f32.partialorder %v414, 0.0004427343
  %v416 = vsel %vm415, %v413, %v410
  %v417 = vadd.f32 %v265, 1.0
  %v418 = vlog2.pop %v417
  %v419 = vmul.f32 %v418, 0.6931472
  %v420 = vmul.f32 -0.5, %v265
  %v421 = vadd.f32 %v420, 1.0
  %v422 = vmul.f32 %v421, %v265
  %v423 = vand.u32 2147483647, %v265
  %vm424 = vcmp.lt.f32.partialorder %v423, 0.0004427343
  %v425 = vsel %vm424, %v422, %v419
  %v426 = vadd.f32 %v267, 1.0
  %v427 = vlog2.pop %v426
  %v428 = vmul.f32 %v427, 0.6931472
  %v429 = vmul.f32 -0.5, %v267
  %v430 = vadd.f32 %v429, 1.0
  %v431 = vmul.f32 %v430, %v267
  %v432 = vand.u32 2147483647, %v267
  %vm433 = vcmp.lt.f32.partialorder %v432, 0.0004427343
  %v434 = vsel %vm433, %v431, %v428
  %v435 = vadd.f32 %v269, 1.0
  %v436 = vlog2.pop %v435
  %v437 = vmul.f32 %v436, 0.6931472
  %v438 = vmul.f32 -0.5, %v269
  %v439 = vadd.f32 %v438, 1.0
  %v440 = vmul.f32 %v439, %v269
  %v441 = vand.u32 2147483647, %v269
  %vm442 = vcmp.lt.f32.partialorder %v441, 0.0004427343
  %v443 = vsel %vm442, %v440, %v437
  %v444 = vadd.f32 %v271, 1.0
  %v445 = vlog2.pop %v444
  %v446 = vmul.f32 %v445, 0.6931472
  %v447 = vmul.f32 -0.5, %v271
  %v448 = vadd.f32 %v447, 1.0
  %v449 = vmul.f32 %v448, %v271
  %v450 = vand.u32 2147483647, %v271
  %vm451 = vcmp.lt.f32.partialorder %v450, 0.0004427343
  %v452 = vsel %vm451, %v449, %v446
  %v453 = vadd.f32 %v273, 1.0
  %v454 = vlog2.pop %v453
  %v455 = vmul.f32 %v454, 0.6931472
  %v456 = vmul.f32 -0.5, %v273
  %v457 = vadd.f32 %v456, 1.0
  %v458 = vmul.f32 %v457, %v273
  %v459 = vand.u32 2147483647, %v273
  %vm460 = vcmp.lt.f32.partialorder %v459, 0.0004427343
  %v461 = vsel %vm460, %v458, %v455
  %v462 = vadd.f32 %v275, 1.0
  %v463 = vlog2.pop %v462
  %v464 = vmul.f32 %v463, 0.6931472
  %v465 = vmul.f32 -0.5, %v275
  %v466 = vadd.f32 %v465, 1.0
  %v467 = vmul.f32 %v466, %v275
  %v468 = vand.u32 2147483647, %v275
  %vm469 = vcmp.lt.f32.partialorder %v468, 0.0004427343
  %v470 = vsel %vm469, %v467, %v464
  %v471 = vadd.f32 %v277, 1.0
  %v472 = vlog2.pop %v471
  %v473 = vmul.f32 %v472, 0.6931472
  %v474 = vmul.f32 -0.5, %v277
  %v475 = vadd.f32 %v474, 1.0
  %v476 = vmul.f32 %v475, %v277
  %v477 = vand.u32 2147483647, %v277
  %vm478 = vcmp.lt.f32.partialorder %v477, 0.0004427343
  %v479 = vsel %vm478, %v476, %v473
  %v480 = vadd.f32 %v279, 1.0
  %v481 = vlog2.pop %v480
  %v482 = vmul.f32 %v481, 0.6931472
  %v483 = vmul.f32 -0.5, %v279
  %v484 = vadd.f32 %v483, 1.0
  %v485 = vmul.f32 %v484, %v279
  %v486 = vand.u32 2147483647, %v279
  %vm487 = vcmp.lt.f32.partialorder %v486, 0.0004427343
  %v488 = vsel %vm487, %v485, %v482
  %v489 = vadd.f32 %v281, 1.0
  %v490 = vlog2.pop %v489
  %v491 = vmul.f32 %v490, 0.6931472
  %v492 = vmul.f32 -0.5, %v281
  %v493 = vadd.f32 %v492, 1.0
  %v494 = vmul.f32 %v493, %v281
  %v495 = vand.u32 2147483647, %v281
  %vm496 = vcmp.lt.f32.partialorder %v495, 0.0004427343
  %v497 = vsel %vm496, %v494, %v491
  %v498 = vadd.f32 %v114, %v290
  %v499 = vadd.f32 %v115, %v299
  %v500 = vadd.f32 %v116, %v308
  %v501 = vadd.f32 %v117, %v317
  %v502 = vadd.f32 %v118, %v326
  %v503 = vadd.f32 %v119, %v335
  %v504 = vadd.f32 %v120, %v344
  %v505 = vadd.f32 %v121, %v353
  %v506 = vadd.f32 %v122, %v362
  %v507 = vadd.f32 %v123, %v371
  %v508 = vadd.f32 %v124, %v380
  %v509 = vadd.f32 %v125, %v389
  %v510 = vadd.f32 %v126, %v398
  %v511 = vadd.f32 %v127, %v407
  %v512 = vadd.f32 %v128, %v416
  %v513 = vadd.f32 %v129, %v425
  %v514 = vadd.f32 %v130, %v434
  %v515 = vadd.f32 %v131, %v443
  %v516 = vadd.f32 %v132, %v452
  %v517 = vadd.f32 %v133, %v461
  %v518 = vadd.f32 %v134, %v470
  %v519 = vadd.f32 %v135, %v479
  %v520 = vadd.f32 %v136, %v488
  %v521 = vadd.f32 %v137, %v497
  %v522 = vsel %vm138, %v162, %v498
  %v523 = vsel %vm139, %v163, %v499
  %v524 = vsel %vm140, %v164, %v500
  %v525 = vsel %vm141, %v165, %v501
  %v526 = vsel %vm142, %v166, %v502
  %v527 = vsel %vm143, %v167, %v503
  %v528 = vsel %vm144, %v168, %v504
  %v529 = vsel %vm145, %v169, %v505
  %v530 = vsel %vm146, %v170, %v506
  %v531 = vsel %vm147, %v171, %v507
  %v532 = vsel %vm148, %v172, %v508
  %v533 = vsel %vm149, %v173, %v509
  %v534 = vsel %vm150, %v174, %v510
  %v535 = vsel %vm151, %v175, %v511
  %v536 = vsel %vm152, %v176, %v512
  %v537 = vsel %vm153, %v177, %v513
  %v538 = vsel %vm154, %v178, %v514
  %v539 = vsel %vm155, %v179, %v515
  %v540 = vsel %vm156, %v180, %v516
  %v541 = vsel %vm157, %v181, %v517
  %v542 = vsel %vm158, %v182, %v518
  %v543 = vsel %vm159, %v183, %v519
  %v544 = vsel %vm160, %v184, %v520
  %v545 = vsel %vm161, %v185, %v521
  %v546 = vtanh.pop %v522
  %v547 = vtanh.pop %v523
  %v548 = vtanh.pop %v524
  %v549 = vtanh.pop %v525
  %v550 = vtanh.pop %v526
  %v551 = vtanh.pop %v527
  %v552 = vtanh.pop %v528
  %v553 = vtanh.pop %v529
  %v554 = vtanh.pop %v530
  %v555 = vtanh.pop %v531
  %v556 = vtanh.pop %v532
  %v557 = vtanh.pop %v533
  %v558 = vtanh.pop %v534
  %v559 = vtanh.pop %v535
  %v560 = vtanh.pop %v536
  %v561 = vtanh.pop %v537
  %v562 = vtanh.pop %v538
  %v563 = vtanh.pop %v539
  %v564 = vtanh.pop %v540
  %v565 = vtanh.pop %v541
  %v566 = vtanh.pop %v542
  %v567 = vtanh.pop %v543
  %v568 = vtanh.pop %v544
  %v569 = vtanh.pop %v545
  %v570 = vmul.f32 %v90, %v546
  %v571 = vmul.f32 %v91, %v547
  %v572 = vmul.f32 %v92, %v548
  %v573 = vmul.f32 %v93, %v549
  %v574 = vmul.f32 %v94, %v550
  %v575 = vmul.f32 %v95, %v551
  %v576 = vmul.f32 %v96, %v552
  %v577 = vmul.f32 %v97, %v553
  %v578 = vmul.f32 %v98, %v554
  %v579 = vmul.f32 %v99, %v555
  %v580 = vmul.f32 %v100, %v556
  %v581 = vmul.f32 %v101, %v557
  %v582 = vmul.f32 %v102, %v558
  %v583 = vmul.f32 %v103, %v559
  %v584 = vmul.f32 %v104, %v560
  %v585 = vmul.f32 %v105, %v561
  %v586 = vmul.f32 %v106, %v562
  %v587 = vmul.f32 %v107, %v563
  %v588 = vmul.f32 %v108, %v564
  %v589 = vmul.f32 %v109, %v565
  %v590 = vmul.f32 %v110, %v566
  %v591 = vmul.f32 %v111, %v567
  %v592 = vmul.f32 %v112, %v568
  %v593 = vmul.f32 %v113, %v569
  %v594 = vlaneseq
  %v595 = vand.u32 %v594, 127
  %v596 = vadd.s32 %v595, 128
  %v597 = vadd.s32 %v595, 256
  %v598 = vld [vmem:[%s3] sm:$0xff]
  %v599 = vld [vmem:[%s3 + $0x8] sm:$0xff]
  %v600 = vld [vmem:[%s3 + $0x10] sm:$0xff]
  %v601 = vld [vmem:[%s3 + $0x18] sm:$0xff]
  %v602 = vld [vmem:[%s3 + $0x20] sm:$0xff]
  %v603 = vld [vmem:[%s3 + $0x28] sm:$0xff]
  %v604 = vld [vmem:[%s3 + $0x30] sm:$0xff]
  %v605 = vld [vmem:[%s3 + $0x38] sm:$0xff]
  %v606 = vld [vmem:[%s4] sm:$0xff]
  %v607 = vld [vmem:[%s4 + $0x8] sm:$0xff]
  %v608 = vld [vmem:[%s4 + $0x10] sm:$0xff]
  %v609 = vld [vmem:[%s4 + $0x18] sm:$0xff]
  %v610 = vld [vmem:[%s4 + $0x20] sm:$0xff]
  %v611 = vld [vmem:[%s4 + $0x28] sm:$0xff]
  %v612 = vld [vmem:[%s4 + $0x30] sm:$0xff]
  %v613 = vld [vmem:[%s4 + $0x38] sm:$0xff]
  %vm614 = vcmp.lt.s32.totalorder %v595, 128
  %vm615 = vcmp.lt.s32.totalorder %v596, 128
  %vm616 = vcmp.lt.s32.totalorder %v597, 128
  %vm617 = vcmp.ge.s32.totalorder %v595, 256
  %vm618 = vcmp.ge.s32.totalorder %v596, 256
  %vm619 = vcmp.ge.s32.totalorder %v597, 256
  %v620 = vsel %vm617, 1, 0
  %v621 = vsel %vm618, 1, 0
  %v622 = vsel %vm619, 1, 0
  %vm623 = vcmp.eq.s32.totalorder %v620, 1
  %vm624 = vcmp.eq.s32.totalorder %v621, 1
  %vm625 = vcmp.eq.s32.totalorder %v622, 1
  %627 = vset.pattern.permute.xlu0 0
  %628 = vperm.xlu0 %627, %v606
  %v629 = vpop.permute.xlu0 %628
  %632 = vset.pattern.permute.xlu0 0
  %633 = vperm.xlu0 %632, %v607
  %v634 = vpop.permute.xlu0 %633
  %637 = vset.pattern.permute.xlu0 0
  %638 = vperm.xlu0 %637, %v608
  %v639 = vpop.permute.xlu0 %638
  %642 = vset.pattern.permute.xlu0 0
  %643 = vperm.xlu0 %642, %v609
  %v644 = vpop.permute.xlu0 %643
  %647 = vset.pattern.permute.xlu0 0
  %648 = vperm.xlu0 %647, %v610
  %v649 = vpop.permute.xlu0 %648
  %652 = vset.pattern.permute.xlu0 0
  %653 = vperm.xlu0 %652, %v611
  %v654 = vpop.permute.xlu0 %653
  %657 = vset.pattern.permute.xlu0 0
  %658 = vperm.xlu0 %657, %v612
  %v659 = vpop.permute.xlu0 %658
  %662 = vset.pattern.permute.xlu0 0
  %663 = vperm.xlu0 %662, %v613
  %v664 = vpop.permute.xlu0 %663
  %v666 = vsel %vm623, %v629, 1.0
  %v667 = vsel %vm624, %v629, 1.0
  %v668 = vsel %vm625, %v629, 1.0
  %v669 = vsel %vm623, %v634, 1.0
  %v670 = vsel %vm624, %v634, 1.0
  %v671 = vsel %vm625, %v634, 1.0
  %v672 = vsel %vm623, %v639, 1.0
  %v673 = vsel %vm624, %v639, 1.0
  %v674 = vsel %vm625, %v639, 1.0
  %v675 = vsel %vm623, %v644, 1.0
  %v676 = vsel %vm624, %v644, 1.0
  %v677 = vsel %vm625, %v644, 1.0
  %v678 = vsel %vm623, %v649, 1.0
  %v679 = vsel %vm624, %v649, 1.0
  %v680 = vsel %vm625, %v649, 1.0
  %v681 = vsel %vm623, %v654, 1.0
  %v682 = vsel %vm624, %v654, 1.0
  %v683 = vsel %vm625, %v654, 1.0
  %v684 = vsel %vm623, %v659, 1.0
  %v685 = vsel %vm624, %v659, 1.0
  %v686 = vsel %vm625, %v659, 1.0
  %v687 = vsel %vm623, %v664, 1.0
  %v688 = vsel %vm624, %v664, 1.0
  %v689 = vsel %vm625, %v664, 1.0
  %v690 = vsel %vm614, 1, 0
  %v691 = vsel %vm615, 1, 0
  %v692 = vsel %vm616, 1, 0
  %vm693 = vcmp.eq.s32.totalorder %v690, 1
  %vm694 = vcmp.eq.s32.totalorder %v691, 1
  %vm695 = vcmp.eq.s32.totalorder %v692, 1
  %697 = vset.pattern.permute.xlu0 0
  %698 = vperm.xlu0 %697, %v598
  %v699 = vpop.permute.xlu0 %698
  %702 = vset.pattern.permute.xlu0 0
  %703 = vperm.xlu0 %702, %v599
  %v704 = vpop.permute.xlu0 %703
  %707 = vset.pattern.permute.xlu0 0
  %708 = vperm.xlu0 %707, %v600
  %v709 = vpop.permute.xlu0 %708
  %712 = vset.pattern.permute.xlu0 0
  %713 = vperm.xlu0 %712, %v601
  %v714 = vpop.permute.xlu0 %713
  %717 = vset.pattern.permute.xlu0 0
  %718 = vperm.xlu0 %717, %v602
  %v719 = vpop.permute.xlu0 %718
  %722 = vset.pattern.permute.xlu0 0
  %723 = vperm.xlu0 %722, %v603
  %v724 = vpop.permute.xlu0 %723
  %727 = vset.pattern.permute.xlu0 0
  %728 = vperm.xlu0 %727, %v604
  %v729 = vpop.permute.xlu0 %728
  %732 = vset.pattern.permute.xlu0 0
  %733 = vperm.xlu0 %732, %v605
  %v734 = vpop.permute.xlu0 %733
  %v736 = vsel %vm693, %v699, %v666
  %v737 = vsel %vm694, %v699, %v667
  %v738 = vsel %vm695, %v699, %v668
  %v739 = vsel %vm693, %v704, %v669
  %v740 = vsel %vm694, %v704, %v670
  %v741 = vsel %vm695, %v704, %v671
  %v742 = vsel %vm693, %v709, %v672
  %v743 = vsel %vm694, %v709, %v673
  %v744 = vsel %vm695, %v709, %v674
  %v745 = vsel %vm693, %v714, %v675
  %v746 = vsel %vm694, %v714, %v676
  %v747 = vsel %vm695, %v714, %v677
  %v748 = vsel %vm693, %v719, %v678
  %v749 = vsel %vm694, %v719, %v679
  %v750 = vsel %vm695, %v719, %v680
  %v751 = vsel %vm693, %v724, %v681
  %v752 = vsel %vm694, %v724, %v682
  %v753 = vsel %vm695, %v724, %v683
  %v754 = vsel %vm693, %v729, %v684
  %v755 = vsel %vm694, %v729, %v685
  %v756 = vsel %vm695, %v729, %v686
  %v757 = vsel %vm693, %v734, %v687
  %v758 = vsel %vm694, %v734, %v688
  %v759 = vsel %vm695, %v734, %v689
  %v760 = vmul.f32 %v570, %v736
  %v761 = vmul.f32 %v571, %v737
  %v762 = vmul.f32 %v572, %v738
  %v763 = vmul.f32 %v573, %v739
  %v764 = vmul.f32 %v574, %v740
  %v765 = vmul.f32 %v575, %v741
  %v766 = vmul.f32 %v576, %v742
  %v767 = vmul.f32 %v577, %v743
  %v768 = vmul.f32 %v578, %v744
  %v769 = vmul.f32 %v579, %v745
  %v770 = vmul.f32 %v580, %v746
  %v771 = vmul.f32 %v581, %v747
  %v772 = vmul.f32 %v582, %v748
  %v773 = vmul.f32 %v583, %v749
  %v774 = vmul.f32 %v584, %v750
  %v775 = vmul.f32 %v585, %v751
  %v776 = vmul.f32 %v586, %v752
  %v777 = vmul.f32 %v587, %v753
  %v778 = vmul.f32 %v588, %v754
  %v779 = vmul.f32 %v589, %v755
  %v780 = vmul.f32 %v590, %v756
  %v781 = vmul.f32 %v591, %v757
  %v782 = vmul.f32 %v592, %v758
  %v783 = vmul.f32 %v593, %v759
  %v784 = vld [vmem:[%s1] sm:$0xff]
  %v785 = vld [vmem:[%s1 + $0x8] sm:$0xff]
  %v786 = vld [vmem:[%s1 + $0x10] sm:$0xff]
  %v787 = vld [vmem:[%s1 + $0x18] sm:$0xff]
  %v788 = vld [vmem:[%s1 + $0x20] sm:$0xff]
  %v789 = vld [vmem:[%s1 + $0x28] sm:$0xff]
  %v790 = vld [vmem:[%s1 + $0x30] sm:$0xff]
  %v791 = vld [vmem:[%s1 + $0x38] sm:$0xff]
  %v792 = vld [vmem:[%s1 + $0x40] sm:$0xff]
  %v793 = vld [vmem:[%s1 + $0x48] sm:$0xff]
  %v794 = vld [vmem:[%s1 + $0x50] sm:$0xff]
  %v795 = vld [vmem:[%s1 + $0x58] sm:$0xff]
  %v796 = vld [vmem:[%s1 + $0x60] sm:$0xff]
  %v797 = vld [vmem:[%s1 + $0x68] sm:$0xff]
  %v798 = vld [vmem:[%s1 + $0x70] sm:$0xff]
  %v799 = vld [vmem:[%s1 + $0x78] sm:$0xff]
  %v800 = vld [vmem:[%s1 + $0x80] sm:$0xff]
  %v801 = vld [vmem:[%s1 + $0x88] sm:$0xff]
  %v802 = vld [vmem:[%s1 + $0x90] sm:$0xff]
  %v803 = vld [vmem:[%s1 + $0x98] sm:$0xff]
  %v804 = vld [vmem:[%s1 + $0xa0] sm:$0xff]
  %v805 = vld [vmem:[%s1 + $0xa8] sm:$0xff]
  %v806 = vld [vmem:[%s1 + $0xb0] sm:$0xff]
  %v807 = vld [vmem:[%s1 + $0xb8] sm:$0xff]
  %v808 = vld [vmem:[%s1 + $0xc0] sm:$0xff]
  %v809 = vld [vmem:[%s1 + $0xc8] sm:$0xff]
  %v810 = vld [vmem:[%s1 + $0xd0] sm:$0xff]
  %v811 = vld [vmem:[%s1 + $0xd8] sm:$0xff]
  %v812 = vld [vmem:[%s1 + $0xe0] sm:$0xff]
  %v813 = vld [vmem:[%s1 + $0xe8] sm:$0xff]
  %v814 = vld [vmem:[%s1 + $0xf0] sm:$0xff]
  %v815 = vld [vmem:[%s1 + $0xf8] sm:$0xff]
  %v816 = vld [vmem:[%s1 + $0x100] sm:$0xff]
  %v817 = vld [vmem:[%s1 + $0x108] sm:$0xff]
  %v818 = vld [vmem:[%s1 + $0x110] sm:$0xff]
  %v819 = vld [vmem:[%s1 + $0x118] sm:$0xff]
  %v820 = vld [vmem:[%s1 + $0x120] sm:$0xff]
  %v821 = vld [vmem:[%s1 + $0x128] sm:$0xff]
  %v822 = vld [vmem:[%s1 + $0x130] sm:$0xff]
  %v823 = vld [vmem:[%s1 + $0x138] sm:$0xff]
  %v824 = vld [vmem:[%s1 + $0x140] sm:$0xff]
  %v825 = vld [vmem:[%s1 + $0x148] sm:$0xff]
  %v826 = vld [vmem:[%s1 + $0x150] sm:$0xff]
  %v827 = vld [vmem:[%s1 + $0x158] sm:$0xff]
  %v828 = vld [vmem:[%s1 + $0x160] sm:$0xff]
  %v829 = vld [vmem:[%s1 + $0x168] sm:$0xff]
  %v830 = vld [vmem:[%s1 + $0x170] sm:$0xff]
  %v831 = vld [vmem:[%s1 + $0x178] sm:$0xff]
  %v832 = vld [vmem:[%s2] sm:$0x1]
  %v834 = vperm.slane %v832, 0
  %836 = vmatpush.msra.mxu0 %v799
  %837 = vmatpush.msra.mxu0 %v798
  %838 = vmatpush.msra.mxu0 %v797
  %839 = vmatpush.msra.mxu0 %v796
  %840 = vmatpush.msra.mxu0 %v795
  %841 = vmatpush.msra.mxu0 %v794
  %842 = vmatpush.msra.mxu0 %v793
  %843 = vmatpush.msra.mxu0 %v792
  %844 = vmatpush.msra.mxu0 %v791
  %845 = vmatpush.msra.mxu0 %v790
  %846 = vmatpush.msra.mxu0 %v789
  %847 = vmatpush.msra.mxu0 %v788
  %848 = vmatpush.msra.mxu0 %v787
  %849 = vmatpush.msra.mxu0 %v786
  %850 = vmatpush.msra.mxu0 %v785
  %851 = vmatpush.msra.mxu0 %v784
  %852 = vmatmul.f32.gmra.mxu0 %v760
  %v853 = vpop.f32.mrf.mxu0
  %v854 = vadd.f32 %v834, %v853
  %855 = vmatmul.f32.gmra.mxu0 %v763
  %v856 = vpop.f32.mrf.mxu0
  %v857 = vadd.f32 %v834, %v856
  %858 = vmatmul.f32.gmra.mxu0 %v766
  %v859 = vpop.f32.mrf.mxu0
  %v860 = vadd.f32 %v834, %v859
  %861 = vmatmul.f32.gmra.mxu0 %v769
  %v862 = vpop.f32.mrf.mxu0
  %v863 = vadd.f32 %v834, %v862
  %864 = vmatmul.f32.gmra.mxu0 %v772
  %v865 = vpop.f32.mrf.mxu0
  %v866 = vadd.f32 %v834, %v865
  %867 = vmatmul.f32.gmra.mxu0 %v775
  %v868 = vpop.f32.mrf.mxu0
  %v869 = vadd.f32 %v834, %v868
  %870 = vmatmul.f32.gmra.mxu0 %v778
  %v871 = vpop.f32.mrf.mxu0
  %v872 = vadd.f32 %v834, %v871
  %873 = vmatmul.f32.gmra.mxu0 %v781
  %v874 = vpop.f32.mrf.mxu0
  %v875 = vadd.f32 %v834, %v874
  %876 = vdwg.mxu0
  %877 = vmatpush.msra.mxu0 %v815
  %878 = vmatpush.msra.mxu0 %v814
  %879 = vmatpush.msra.mxu0 %v813
  %880 = vmatpush.msra.mxu0 %v812
  %881 = vmatpush.msra.mxu0 %v811
  %882 = vmatpush.msra.mxu0 %v810
  %883 = vmatpush.msra.mxu0 %v809
  %884 = vmatpush.msra.mxu0 %v808
  %885 = vmatpush.msra.mxu0 %v807
  %886 = vmatpush.msra.mxu0 %v806
  %887 = vmatpush.msra.mxu0 %v805
  %888 = vmatpush.msra.mxu0 %v804
  %889 = vmatpush.msra.mxu0 %v803
  %890 = vmatpush.msra.mxu0 %v802
  %891 = vmatpush.msra.mxu0 %v801
  %892 = vmatpush.msra.mxu0 %v800
  %893 = vmatmul.f32.gmra.mxu0 %v761
  %v894 = vpop.f32.mrf.mxu0
  %v895 = vadd.f32 %v854, %v894
  %896 = vmatmul.f32.gmra.mxu0 %v764
  %v897 = vpop.f32.mrf.mxu0
  %v898 = vadd.f32 %v857, %v897
  %899 = vmatmul.f32.gmra.mxu0 %v767
  %v900 = vpop.f32.mrf.mxu0
  %v901 = vadd.f32 %v860, %v900
  %902 = vmatmul.f32.gmra.mxu0 %v770
  %v903 = vpop.f32.mrf.mxu0
  %v904 = vadd.f32 %v863, %v903
  %905 = vmatmul.f32.gmra.mxu0 %v773
  %v906 = vpop.f32.mrf.mxu0
  %v907 = vadd.f32 %v866, %v906
  %908 = vmatmul.f32.gmra.mxu0 %v776
  %v909 = vpop.f32.mrf.mxu0
  %v910 = vadd.f32 %v869, %v909
  %911 = vmatmul.f32.gmra.mxu0 %v779
  %v912 = vpop.f32.mrf.mxu0
  %v913 = vadd.f32 %v872, %v912
  %914 = vmatmul.f32.gmra.mxu0 %v782
  %v915 = vpop.f32.mrf.mxu0
  %v916 = vadd.f32 %v875, %v915
  %917 = vdwg.mxu0
  %918 = vmatpush.msra.mxu0 %v831
  %919 = vmatpush.msra.mxu0 %v830
  %920 = vmatpush.msra.mxu0 %v829
  %921 = vmatpush.msra.mxu0 %v828
  %922 = vmatpush.msra.mxu0 %v827
  %923 = vmatpush.msra.mxu0 %v826
  %924 = vmatpush.msra.mxu0 %v825
  %925 = vmatpush.msra.mxu0 %v824
  %926 = vmatpush.msra.mxu0 %v823
  %927 = vmatpush.msra.mxu0 %v822
  %928 = vmatpush.msra.mxu0 %v821
  %929 = vmatpush.msra.mxu0 %v820
  %930 = vmatpush.msra.mxu0 %v819
  %931 = vmatpush.msra.mxu0 %v818
  %932 = vmatpush.msra.mxu0 %v817
  %933 = vmatpush.msra.mxu0 %v816
  %934 = vmatmul.f32.gmra.mxu0 %v762
  %v935 = vpop.f32.mrf.mxu0
  %v936 = vadd.f32 %v895, %v935
  %937 = vmatmul.f32.gmra.mxu0 %v765
  %v938 = vpop.f32.mrf.mxu0
  %v939 = vadd.f32 %v898, %v938
  %940 = vmatmul.f32.gmra.mxu0 %v768
  %v941 = vpop.f32.mrf.mxu0
  %v942 = vadd.f32 %v901, %v941
  %943 = vmatmul.f32.gmra.mxu0 %v771
  %v944 = vpop.f32.mrf.mxu0
  %v945 = vadd.f32 %v904, %v944
  %946 = vmatmul.f32.gmra.mxu0 %v774
  %v947 = vpop.f32.mrf.mxu0
  %v948 = vadd.f32 %v907, %v947
  %949 = vmatmul.f32.gmra.mxu0 %v777
  %v950 = vpop.f32.mrf.mxu0
  %v951 = vadd.f32 %v910, %v950
  %952 = vmatmul.f32.gmra.mxu0 %v780
  %v953 = vpop.f32.mrf.mxu0
  %v954 = vadd.f32 %v913, %v953
  %955 = vmatmul.f32.gmra.mxu0 %v783
  %v956 = vpop.f32.mrf.mxu0
  %v957 = vadd.f32 %v916, %v956
  %958 = vdwg.mxu0
  %v959 = vtanh.pop %v936
  %v960 = vtanh.pop %v939
  %v961 = vtanh.pop %v942
  %v962 = vtanh.pop %v945
  %v963 = vtanh.pop %v948
  %v964 = vtanh.pop %v951
  %v965 = vtanh.pop %v954
  %v966 = vtanh.pop %v957
  %967 = vst [vmem:[%s7] sm:$0xff] %v959
  %968 = vst [vmem:[%s7 + $0x8] sm:$0xff] %v960
  %969 = vst [vmem:[%s7 + $0x10] sm:$0xff] %v961
  %970 = vst [vmem:[%s7 + $0x18] sm:$0xff] %v962
  %971 = vst [vmem:[%s7 + $0x20] sm:$0xff] %v963
  %972 = vst [vmem:[%s7 + $0x28] sm:$0xff] %v964
  %973 = vst [vmem:[%s7 + $0x30] sm:$0xff] %v965
  %974 = vst [vmem:[%s7 + $0x38] sm:$0xff] %v966
  // Predicated region
  $region30: #{decoder_forward.5} parent=0 // pred_check
    _
  $region31: #{decoder_forward.5} parent=0 // pred_check_branch
    %976 = sbr.rel (0) target = $region33
  $region32: #{decoder_forward.5} parent=0 // pred_region
    _
  $region33: #{decoder_forward.5} parent=0 // pred_fallthru
    _
  // Predicated region
  $region34: #{decoder_forward.5} parent=0 // pred_check
    _
  $region35: #{decoder_forward.5} parent=0 // pred_check_branch
    %978 = sbr.rel (0) target = $region37
  $region36: #{decoder_forward.5} parent=0 // pred_region
    _
  $region37: #{decoder_forward.5} parent=0 // pred_fallthru
    _

// kernel: decoder_forward.4
$region0: #{decoder_forward.4}
  #allocation0 [shape = 'u32[]', space=smem, size = 0x4, offset = 0x4, fixed_abs, tag = 'smem constant byte address 0x4 - core index']
  #allocation1 [shape = 'u32[72,128]{1,0:T(1,128)}', space=vmem, size = 0x9000, scoped, tag = 'internal scratch']
  %s0 = inlined_call_operand.vmem [shape: f32[64,384], index: 0, kind: input, shape index: {}]
  %s1 = inlined_call_operand.vmem [shape: f32[384,128], index: 1, kind: input, shape index: {}]
  %s2 = inlined_call_operand.vmem [shape: f32[1,128], index: 2, kind: input, shape index: {}]
  %s3 = inlined_call_operand.vmem [shape: f32[64,1], index: 3, kind: input, shape index: {}]
  %s4 = inlined_call_operand.vmem [shape: f32[64,1], index: 4, kind: input, shape index: {}]
  %s5 = inlined_call_operand.vmem [shape: f32[1,384], index: 5, kind: input, shape index: {}]
  %s6 = inlined_call_operand.vmem [shape: f32[1,384], index: 6, kind: input, shape index: {}]
  %s7 = inlined_call_operand.vmem [shape: f32[64,128], index: 7, kind: output, shape index: {0}]
  %s8 = inlined_call_operand.vmem [shape: f32[1,128], index: 8, kind: output, shape index: {1}]
  %s9 = inlined_call_operand.vmem [shape: f32[1,128], index: 9, kind: output, shape index: {2}]
  %10 = xla_tuple %s7, %s8, %s9
  %s11 = sld [smem:[#allocation0]]
  $region58: #{decoder_forward.4} parent=0
    _
  %s13 = ssub.s32 1, %s11
  %s14 = scalar_select 0, %s13, %s11
  // Predicated region
  $region2: #{decoder_forward.4} parent=0 // pred_check
    _
  $region3: #{decoder_forward.4} parent=0 // pred_check_branch
    %16 = sbr.rel (0) target = $region5
  $region4: #{decoder_forward.4} parent=0 // pred_region
    _
  $region5: #{decoder_forward.4} parent=0 // pred_fallthru
    _
  // Predicated region
  $region6: #{decoder_forward.4} parent=0 // pred_check
    _
  $region7: #{decoder_forward.4} parent=0 // pred_check_branch
    %18 = sbr.rel (0) target = $region9
  $region8: #{decoder_forward.4} parent=0 // pred_region
    _
  $region9: #{decoder_forward.4} parent=0 // pred_fallthru
    _
  // Predicated region
  $region10: #{decoder_forward.4} parent=0 // pred_check
    _
  $region11: #{decoder_forward.4} parent=0 // pred_check_branch
    %20 = sbr.rel (0) target = $region13
  $region12: #{decoder_forward.4} parent=0 // pred_region
    _
  $region13: #{decoder_forward.4} parent=0 // pred_fallthru
    _
  // Predicated region
  $region14: #{decoder_forward.4} parent=0 // pred_check
    _
  $region15: #{decoder_forward.4} parent=0 // pred_check_branch
    %22 = sbr.rel (0) target = $region17
  $region16: #{decoder_forward.4} parent=0 // pred_region
    _
  $region17: #{decoder_forward.4} parent=0 // pred_fallthru
    _
  // Predicated region
  $region18: #{decoder_forward.4} parent=0 // pred_check
    _
  $region19: #{decoder_forward.4} parent=0 // pred_check_branch
    %24 = sbr.rel (0) target = $region21
  $region20: #{decoder_forward.4} parent=0 // pred_region
    _
  $region21: #{decoder_forward.4} parent=0 // pred_fallthru
    _
  // Predicated region
  $region22: #{decoder_forward.4} parent=0 // pred_check
    _
  $region23: #{decoder_forward.4} parent=0 // pred_check_branch
    %26 = sbr.rel (0) target = $region25
  $region24: #{decoder_forward.4} parent=0 // pred_region
    _
  $region25: #{decoder_forward.4} parent=0 // pred_fallthru
    _
  // Predicated region
  $region26: #{decoder_forward.4} parent=0 // pred_check
    _
  $region27: #{decoder_forward.4} parent=0 // pred_check_branch
    %28 = sbr.rel (0) target = $region29
  $region28: #{decoder_forward.4} parent=0 // pred_region
    _
  $region29: #{decoder_forward.4} parent=0 // pred_fallthru
    _
  %v29 = vld [vmem:[%s0] sm:$0xff]
  %v30 = vld [vmem:[%s0 + $0x8] sm:$0xff]
  %v31 = vld [vmem:[%s0 + $0x10] sm:$0xff]
  %v32 = vld [vmem:[%s0 + $0x18] sm:$0xff]
  %v33 = vld [vmem:[%s0 + $0x20] sm:$0xff]
  %v34 = vld [vmem:[%s0 + $0x28] sm:$0xff]
  %v35 = vld [vmem:[%s0 + $0x30] sm:$0xff]
  %v36 = vld [vmem:[%s0 + $0x38] sm:$0xff]
  %v37 = vld [vmem:[%s0 + $0x40] sm:$0xff]
  %v38 = vld [vmem:[%s0 + $0x48] sm:$0xff]
  %v39 = vld [vmem:[%s0 + $0x50] sm:$0xff]
  %v40 = vld [vmem:[%s0 + $0x58] sm:$0xff]
  %v41 = vld [vmem:[%s0 + $0x60] sm:$0xff]
  %v42 = vld [vmem:[%s0 + $0x68] sm:$0xff]
  %v43 = vld [vmem:[%s0 + $0x70] sm:$0xff]
  %v44 = vld [vmem:[%s0 + $0x78] sm:$0xff]
  %v45 = vld [vmem:[%s0 + $0x80] sm:$0xff]
  %v46 = vld [vmem:[%s0 + $0x88] sm:$0xff]
  %v47 = vld [vmem:[%s0 + $0x90] sm:$0xff]
  %v48 = vld [vmem:[%s0 + $0x98] sm:$0xff]
  %v49 = vld [vmem:[%s0 + $0xa0] sm:$0xff]
  %v50 = vld [vmem:[%s0 + $0xa8] sm:$0xff]
  %v51 = vld [vmem:[%s0 + $0xb0] sm:$0xff]
  %v52 = vld [vmem:[%s0 + $0xb8] sm:$0xff]
  %v53 = vld [vmem:[%s5] sm:$0x7]
  %v55 = vperm.slane %v53, 0
  %v56 = vperm.slane %v53, 1
  %v57 = vperm.slane %v53, 2
  %v61 = vmul.f32 %v29, %v55
  %v62 = vmul.f32 %v30, %v56
  %v63 = vmul.f32 %v31, %v57
  %v64 = vmul.f32 %v32, %v55
  %v65 = vmul.f32 %v33, %v56
  %v66 = vmul.f32 %v34, %v57
  %v67 = vmul.f32 %v35, %v55
  %v68 = vmul.f32 %v36, %v56
  %v69 = vmul.f32 %v37, %v57
  %v70 = vmul.f32 %v38, %v55
  %v71 = vmul.f32 %v39, %v56
  %v72 = vmul.f32 %v40, %v57
  %v73 = vmul.f32 %v41, %v55
  %v74 = vmul.f32 %v42, %v56
  %v75 = vmul.f32 %v43, %v57
  %v76 = vmul.f32 %v44, %v55
  %v77 = vmul.f32 %v45, %v56
  %v78 = vmul.f32 %v46, %v57
  %v79 = vmul.f32 %v47, %v55
  %v80 = vmul.f32 %v48, %v56
  %v81 = vmul.f32 %v49, %v57
  %v82 = vmul.f32 %v50, %v55
  %v83 = vmul.f32 %v51, %v56
  %v84 = vmul.f32 %v52, %v57
  %v85 = vld [vmem:[%s6] sm:$0x7]
  %v87 = vperm.slane %v85, 0
  %v88 = vperm.slane %v85, 1
  %v89 = vperm.slane %v85, 2
  %v93 = vadd.f32 %v61, %v87
  %v94 = vadd.f32 %v62, %v88
  %v95 = vadd.f32 %v63, %v89
  %v96 = vadd.f32 %v64, %v87
  %v97 = vadd.f32 %v65, %v88
  %v98 = vadd.f32 %v66, %v89
  %v99 = vadd.f32 %v67, %v87
  %v100 = vadd.f32 %v68, %v88
  %v101 = vadd.f32 %v69, %v89
  %v102 = vadd.f32 %v70, %v87
  %v103 = vadd.f32 %v71, %v88
  %v104 = vadd.f32 %v72, %v89
  %v105 = vadd.f32 %v73, %v87
  %v106 = vadd.f32 %v74, %v88
  %v107 = vadd.f32 %v75, %v89
  %v108 = vadd.f32 %v76, %v87
  %v109 = vadd.f32 %v77, %v88
  %v110 = vadd.f32 %v78, %v89
  %v111 = vadd.f32 %v79, %v87
  %v112 = vadd.f32 %v80, %v88
  %v113 = vadd.f32 %v81, %v89
  %v114 = vadd.f32 %v82, %v87
  %v115 = vadd.f32 %v83, %v88
  %v116 = vadd.f32 %v84, %v89
  %v117 = vmax.f32 %v93, 0.0
  %v118 = vmax.f32 %v94, 0.0
  %v119 = vmax.f32 %v95, 0.0
  %v120 = vmax.f32 %v96, 0.0
  %v121 = vmax.f32 %v97, 0.0
  %v122 = vmax.f32 %v98, 0.0
  %v123 = vmax.f32 %v99, 0.0
  %v124 = vmax.f32 %v100, 0.0
  %v125 = vmax.f32 %v101, 0.0
  %v126 = vmax.f32 %v102, 0.0
  %v127 = vmax.f32 %v103, 0.0
  %v128 = vmax.f32 %v104, 0.0
  %v129 = vmax.f32 %v105, 0.0
  %v130 = vmax.f32 %v106, 0.0
  %v131 = vmax.f32 %v107, 0.0
  %v132 = vmax.f32 %v108, 0.0
  %v133 = vmax.f32 %v109, 0.0
  %v134 = vmax.f32 %v110, 0.0
  %v135 = vmax.f32 %v111, 0.0
  %v136 = vmax.f32 %v112, 0.0
  %v137 = vmax.f32 %v113, 0.0
  %v138 = vmax.f32 %v114, 0.0
  %v139 = vmax.f32 %v115, 0.0
  %v140 = vmax.f32 %v116, 0.0
  %vm141 = vcmp.ne.f32.partialorder %v93, %v93
  %vm142 = vcmp.ne.f32.partialorder %v94, %v94
  %vm143 = vcmp.ne.f32.partialorder %v95, %v95
  %vm144 = vcmp.ne.f32.partialorder %v96, %v96
  %vm145 = vcmp.ne.f32.partialorder %v97, %v97
  %vm146 = vcmp.ne.f32.partialorder %v98, %v98
  %vm147 = vcmp.ne.f32.partialorder %v99, %v99
  %vm148 = vcmp.ne.f32.partialorder %v100, %v100
  %vm149 = vcmp.ne.f32.partialorder %v101, %v101
  %vm150 = vcmp.ne.f32.partialorder %v102, %v102
  %vm151 = vcmp.ne.f32.partialorder %v103, %v103
  %vm152 = vcmp.ne.f32.partialorder %v104, %v104
  %vm153 = vcmp.ne.f32.partialorder %v105, %v105
  %vm154 = vcmp.ne.f32.partialorder %v106, %v106
  %vm155 = vcmp.ne.f32.partialorder %v107, %v107
  %vm156 = vcmp.ne.f32.partialorder %v108, %v108
  %vm157 = vcmp.ne.f32.partialorder %v109, %v109
  %vm158 = vcmp.ne.f32.partialorder %v110, %v110
  %vm159 = vcmp.ne.f32.partialorder %v111, %v111
  %vm160 = vcmp.ne.f32.partialorder %v112, %v112
  %vm161 = vcmp.ne.f32.partialorder %v113, %v113
  %vm162 = vcmp.ne.f32.partialorder %v114, %v114
  %vm163 = vcmp.ne.f32.partialorder %v115, %v115
  %vm164 = vcmp.ne.f32.partialorder %v116, %v116
  %v165 = vadd.f32 %v93, 0.0
  %v166 = vadd.f32 %v94, 0.0
  %v167 = vadd.f32 %v95, 0.0
  %v168 = vadd.f32 %v96, 0.0
  %v169 = vadd.f32 %v97, 0.0
  %v170 = vadd.f32 %v98, 0.0
  %v171 = vadd.f32 %v99, 0.0
  %v172 = vadd.f32 %v100, 0.0
  %v173 = vadd.f32 %v101, 0.0
  %v174 = vadd.f32 %v102, 0.0
  %v175 = vadd.f32 %v103, 0.0
  %v176 = vadd.f32 %v104, 0.0
  %v177 = vadd.f32 %v105, 0.0
  %v178 = vadd.f32 %v106, 0.0
  %v179 = vadd.f32 %v107, 0.0
  %v180 = vadd.f32 %v108, 0.0
  %v181 = vadd.f32 %v109, 0.0
  %v182 = vadd.f32 %v110, 0.0
  %v183 = vadd.f32 %v111, 0.0
  %v184 = vadd.f32 %v112, 0.0
  %v185 = vadd.f32 %v113, 0.0
  %v186 = vadd.f32 %v114, 0.0
  %v187 = vadd.f32 %v115, 0.0
  %v188 = vadd.f32 %v116, 0.0
  %v189 = vand.u32 2147483647, %v93
  %v190 = vand.u32 2147483647, %v94
  %v191 = vand.u32 2147483647, %v95
  %v192 = vand.u32 2147483647, %v96
  %v193 = vand.u32 2147483647, %v97
  %v194 = vand.u32 2147483647, %v98
  %v195 = vand.u32 2147483647, %v99
  %v196 = vand.u32 2147483647, %v100
  %v197 = vand.u32 2147483647, %v101
  %v198 = vand.u32 2147483647, %v102
  %v199 = vand.u32 2147483647, %v103
  %v200 = vand.u32 2147483647, %v104
  %v201 = vand.u32 2147483647, %v105
  %v202 = vand.u32 2147483647, %v106
  %v203 = vand.u32 2147483647, %v107
  %v204 = vand.u32 2147483647, %v108
  %v205 = vand.u32 2147483647, %v109
  %v206 = vand.u32 2147483647, %v110
  %v207 = vand.u32 2147483647, %v111
  %v208 = vand.u32 2147483647, %v112
  %v209 = vand.u32 2147483647, %v113
  %v210 = vand.u32 2147483647, %v114
  %v211 = vand.u32 2147483647, %v115
  %v212 = vand.u32 2147483647, %v116
  %v213 = vsub.f32 0.0, %v189
  %v214 = vsub.f32 0.0, %v190
  %v215 = vsub.f32 0.0, %v191
  %v216 = vsub.f32 0.0, %v192
  %v217 = vsub.f32 0.0, %v193
  %v218 = vsub.f32 0.0, %v194
  %v219 = vsub.f32 0.0, %v195
  %v220 = vsub.f32 0.0, %v196
  %v221 = vsub.f32 0.0, %v197
  %v222 = vsub.f32 0.0, %v198
  %v223 = vsub.f32 0.0, %v199
  %v224 = vsub.f32 0.0, %v200
  %v225 = vsub.f32 0.0, %v201
  %v226 = vsub.f32 0.0, %v202
  %v227 = vsub.f32 0.0, %v203
  %v228 = vsub.f32 0.0, %v204
  %v229 = vsub.f32 0.0, %v205
  %v230 = vsub.f32 0.0, %v206
  %v231 = vsub.f32 0.0, %v207
  %v232 = vsub.f32 0.0, %v208
  %v233 = vsub.f32 0.0, %v209
  %v234 = vsub.f32 0.0, %v210
  %v235 = vsub.f32 0.0, %v211
  %v236 = vsub.f32 0.0, %v212
  %v237 = vmul.f32 %v213, 1.442695
  %v238 = vpow.pop %v237
  %v239 = vmul.f32 %v214, 1.442695
  %v240 = vpow.pop %v239
  %v241 = vmul.f32 %v215, 1.442695
  %v242 = vpow.pop %v241
  %v243 = vmul.f32 %v216, 1.442695
  %v244 = vpow.pop %v243
  %v245 = vmul.f32 %v217, 1.442695
  %v246 = vpow.pop %v245
  %v247 = vmul.f32 %v218, 1.442695
  %v248 = vpow.pop %v247
  %v249 = vmul.f32 %v219, 1.442695
  %v250 = vpow.pop %v249
  %v251 = vmul.f32 %v220, 1.442695
  %v252 = vpow.pop %v251
  %v253 = vmul.f32 %v221, 1.442695
  %v254 = vpow.pop %v253
  %v255 = vmul.f32 %v222, 1.442695
  %v256 = vpow.pop %v255
  %v257 = vmul.f32 %v223, 1.442695
  %v258 = vpow.pop %v257
  %v259 = vmul.f32 %v224, 1.442695
  %v260 = vpow.pop %v259
  %v261 = vmul.f32 %v225, 1.442695
  %v262 = vpow.pop %v261
  %v263 = vmul.f32 %v226, 1.442695
  %v264 = vpow.pop %v263
  %v265 = vmul.f32 %v227, 1.442695
  %v266 = vpow.pop %v265
  %v267 = vmul.f32 %v228, 1.442695
  %v268 = vpow.pop %v267
  %v269 = vmul.f32 %v229, 1.442695
  %v270 = vpow.pop %v269
  %v271 = vmul.f32 %v230, 1.442695
  %v272 = vpow.pop %v271
  %v273 = vmul.f32 %v231, 1.442695
  %v274 = vpow.pop %v273
  %v275 = vmul.f32 %v232, 1.442695
  %v276 = vpow.pop %v275
  %v277 = vmul.f32 %v233, 1.442695
  %v278 = vpow.pop %v277
  %v279 = vmul.f32 %v234, 1.442695
  %v280 = vpow.pop %v279
  %v281 = vmul.f32 %v235, 1.442695
  %v282 = vpow.pop %v281
  %v283 = vmul.f32 %v236, 1.442695
  %v284 = vpow.pop %v283
  %v285 = vadd.f32 %v238, 1.0
  %v286 = vlog2.pop %v285
  %v287 = vmul.f32 %v286, 0.6931472
  %v288 = vmul.f32 -0.5, %v238
  %v289 = vadd.f32 %v288, 1.0
  %v290 = vmul.f32 %v289, %v238
  %v291 = vand.u32 2147483647, %v238
  %vm292 = vcmp.lt.f32.partialorder %v291, 0.0004427343
  %v293 = vsel %vm292, %v290, %v287
  %v294 = vadd.f32 %v240, 1.0
  %v295 = vlog2.pop %v294
  %v296 = vmul.f32 %v295, 0.6931472
  %v297 = vmul.f32 -0.5, %v240
  %v298 = vadd.f32 %v297, 1.0
  %v299 = vmul.f32 %v298, %v240
  %v300 = vand.u32 2147483647, %v240
  %vm301 = vcmp.lt.f32.partialorder %v300, 0.0004427343
  %v302 = vsel %vm301, %v299, %v296
  %v303 = vadd.f32 %v242, 1.0
  %v304 = vlog2.pop %v303
  %v305 = vmul.f32 %v304, 0.6931472
  %v306 = vmul.f32 -0.5, %v242
  %v307 = vadd.f32 %v306, 1.0
  %v308 = vmul.f32 %v307, %v242
  %v309 = vand.u32 2147483647, %v242
  %vm310 = vcmp.lt.f32.partialorder %v309, 0.0004427343
  %v311 = vsel %vm310, %v308, %v305
  %v312 = vadd.f32 %v244, 1.0
  %v313 = vlog2.pop %v312
  %v314 = vmul.f32 %v313, 0.6931472
  %v315 = vmul.f32 -0.5, %v244
  %v316 = vadd.f32 %v315, 1.0
  %v317 = vmul.f32 %v316, %v244
  %v318 = vand.u32 2147483647, %v244
  %vm319 = vcmp.lt.f32.partialorder %v318, 0.0004427343
  %v320 = vsel %vm319, %v317, %v314
  %v321 = vadd.f32 %v246, 1.0
  %v322 = vlog2.pop %v321
  %v323 = vmul.f32 %v322, 0.6931472
  %v324 = vmul.f32 -0.5, %v246
  %v325 = vadd.f32 %v324, 1.0
  %v326 = vmul.f32 %v325, %v246
  %v327 = vand.u32 2147483647, %v246
  %vm328 = vcmp.lt.f32.partialorder %v327, 0.0004427343
  %v329 = vsel %vm328, %v326, %v323
  %v330 = vadd.f32 %v248, 1.0
  %v331 = vlog2.pop %v330
  %v332 = vmul.f32 %v331, 0.6931472
  %v333 = vmul.f32 -0.5, %v248
  %v334 = vadd.f32 %v333, 1.0
  %v335 = vmul.f32 %v334, %v248
  %v336 = vand.u32 2147483647, %v248
  %vm337 = vcmp.lt.f32.partialorder %v336, 0.0004427343
  %v338 = vsel %vm337, %v335, %v332
  %v339 = vadd.f32 %v250, 1.0
  %v340 = vlog2.pop %v339
  %v341 = vmul.f32 %v340, 0.6931472
  %v342 = vmul.f32 -0.5, %v250
  %v343 = vadd.f32 %v342, 1.0
  %v344 = vmul.f32 %v343, %v250
  %v345 = vand.u32 2147483647, %v250
  %vm346 = vcmp.lt.f32.partialorder %v345, 0.0004427343
  %v347 = vsel %vm346, %v344, %v341
  %v348 = vadd.f32 %v252, 1.0
  %v349 = vlog2.pop %v348
  %v350 = vmul.f32 %v349, 0.6931472
  %v351 = vmul.f32 -0.5, %v252
  %v352 = vadd.f32 %v351, 1.0
  %v353 = vmul.f32 %v352, %v252
  %v354 = vand.u32 2147483647, %v252
  %vm355 = vcmp.lt.f32.partialorder %v354, 0.0004427343
  %v356 = vsel %vm355, %v353, %v350
  %v357 = vadd.f32 %v254, 1.0
  %v358 = vlog2.pop %v357
  %v359 = vmul.f32 %v358, 0.6931472
  %v360 = vmul.f32 -0.5, %v254
  %v361 = vadd.f32 %v360, 1.0
  %v362 = vmul.f32 %v361, %v254
  %v363 = vand.u32 2147483647, %v254
  %vm364 = vcmp.lt.f32.partialorder %v363, 0.0004427343
  %v365 = vsel %vm364, %v362, %v359
  %v366 = vadd.f32 %v256, 1.0
  %v367 = vlog2.pop %v366
  %v368 = vmul.f32 %v367, 0.6931472
  %v369 = vmul.f32 -0.5, %v256
  %v370 = vadd.f32 %v369, 1.0
  %v371 = vmul.f32 %v370, %v256
  %v372 = vand.u32 2147483647, %v256
  %vm373 = vcmp.lt.f32.partialorder %v372, 0.0004427343
  %v374 = vsel %vm373, %v371, %v368
  %v375 = vadd.f32 %v258, 1.0
  %v376 = vlog2.pop %v375
  %v377 = vmul.f32 %v376, 0.6931472
  %v378 = vmul.f32 -0.5, %v258
  %v379 = vadd.f32 %v378, 1.0
  %v380 = vmul.f32 %v379, %v258
  %v381 = vand.u32 2147483647, %v258
  %vm382 = vcmp.lt.f32.partialorder %v381, 0.0004427343
  %v383 = vsel %vm382, %v380, %v377
  %v384 = vadd.f32 %v260, 1.0
  %v385 = vlog2.pop %v384
  %v386 = vmul.f32 %v385, 0.6931472
  %v387 = vmul.f32 -0.5, %v260
  %v388 = vadd.f32 %v387, 1.0
  %v389 = vmul.f32 %v388, %v260
  %v390 = vand.u32 2147483647, %v260
  %vm391 = vcmp.lt.f32.partialorder %v390, 0.0004427343
  %v392 = vsel %vm391, %v389, %v386
  %v393 = vadd.f32 %v262, 1.0
  %v394 = vlog2.pop %v393
  %v395 = vmul.f32 %v394, 0.6931472
  %v396 = vmul.f32 -0.5, %v262
  %v397 = vadd.f32 %v396, 1.0
  %v398 = vmul.f32 %v397, %v262
  %v399 = vand.u32 2147483647, %v262
  %vm400 = vcmp.lt.f32.partialorder %v399, 0.0004427343
  %v401 = vsel %vm400, %v398, %v395
  %v402 = vadd.f32 %v264, 1.0
  %v403 = vlog2.pop %v402
  %v404 = vmul.f32 %v403, 0.6931472
  %v405 = vmul.f32 -0.5, %v264
  %v406 = vadd.f32 %v405, 1.0
  %v407 = vmul.f32 %v406, %v264
  %v408 = vand.u32 2147483647, %v264
  %vm409 = vcmp.lt.f32.partialorder %v408, 0.0004427343
  %v410 = vsel %vm409, %v407, %v404
  %v411 = vadd.f32 %v266, 1.0
  %v412 = vlog2.pop %v411
  %v413 = vmul.f32 %v412, 0.6931472
  %v414 = vmul.f32 -0.5, %v266
  %v415 = vadd.f32 %v414, 1.0
  %v416 = vmul.f32 %v415, %v266
  %v417 = vand.u32 2147483647, %v266
  %vm418 = vcmp.lt.f32.partialorder %v417, 0.0004427343
  %v419 = vsel %vm418, %v416, %v413
  %v420 = vadd.f32 %v268, 1.0
  %v421 = vlog2.pop %v420
  %v422 = vmul.f32 %v421, 0.6931472
  %v423 = vmul.f32 -0.5, %v268
  %v424 = vadd.f32 %v423, 1.0
  %v425 = vmul.f32 %v424, %v268
  %v426 = vand.u32 2147483647, %v268
  %vm427 = vcmp.lt.f32.partialorder %v426, 0.0004427343
  %v428 = vsel %vm427, %v425, %v422
  %v429 = vadd.f32 %v270, 1.0
  %v430 = vlog2.pop %v429
  %v431 = vmul.f32 %v430, 0.6931472
  %v432 = vmul.f32 -0.5, %v270
  %v433 = vadd.f32 %v432, 1.0
  %v434 = vmul.f32 %v433, %v270
  %v435 = vand.u32 2147483647, %v270
  %vm436 = vcmp.lt.f32.partialorder %v435, 0.0004427343
  %v437 = vsel %vm436, %v434, %v431
  %v438 = vadd.f32 %v272, 1.0
  %v439 = vlog2.pop %v438
  %v440 = vmul.f32 %v439, 0.6931472
  %v441 = vmul.f32 -0.5, %v272
  %v442 = vadd.f32 %v441, 1.0
  %v443 = vmul.f32 %v442, %v272
  %v444 = vand.u32 2147483647, %v272
  %vm445 = vcmp.lt.f32.partialorder %v444, 0.0004427343
  %v446 = vsel %vm445, %v443, %v440
  %v447 = vadd.f32 %v274, 1.0
  %v448 = vlog2.pop %v447
  %v449 = vmul.f32 %v448, 0.6931472
  %v450 = vmul.f32 -0.5, %v274
  %v451 = vadd.f32 %v450, 1.0
  %v452 = vmul.f32 %v451, %v274
  %v453 = vand.u32 2147483647, %v274
  %vm454 = vcmp.lt.f32.partialorder %v453, 0.0004427343
  %v455 = vsel %vm454, %v452, %v449
  %v456 = vadd.f32 %v276, 1.0
  %v457 = vlog2.pop %v456
  %v458 = vmul.f32 %v457, 0.6931472
  %v459 = vmul.f32 -0.5, %v276
  %v460 = vadd.f32 %v459, 1.0
  %v461 = vmul.f32 %v460, %v276
  %v462 = vand.u32 2147483647, %v276
  %vm463 = vcmp.lt.f32.partialorder %v462, 0.0004427343
  %v464 = vsel %vm463, %v461, %v458
  %v465 = vadd.f32 %v278, 1.0
  %v466 = vlog2.pop %v465
  %v467 = vmul.f32 %v466, 0.6931472
  %v468 = vmul.f32 -0.5, %v278
  %v469 = vadd.f32 %v468, 1.0
  %v470 = vmul.f32 %v469, %v278
  %v471 = vand.u32 2147483647, %v278
  %vm472 = vcmp.lt.f32.partialorder %v471, 0.0004427343
  %v473 = vsel %vm472, %v470, %v467
  %v474 = vadd.f32 %v280, 1.0
  %v475 = vlog2.pop %v474
  %v476 = vmul.f32 %v475, 0.6931472
  %v477 = vmul.f32 -0.5, %v280
  %v478 = vadd.f32 %v477, 1.0
  %v479 = vmul.f32 %v478, %v280
  %v480 = vand.u32 2147483647, %v280
  %vm481 = vcmp.lt.f32.partialorder %v480, 0.0004427343
  %v482 = vsel %vm481, %v479, %v476
  %v483 = vadd.f32 %v282, 1.0
  %v484 = vlog2.pop %v483
  %v485 = vmul.f32 %v484, 0.6931472
  %v486 = vmul.f32 -0.5, %v282
  %v487 = vadd.f32 %v486, 1.0
  %v488 = vmul.f32 %v487, %v282
  %v489 = vand.u32 2147483647, %v282
  %vm490 = vcmp.lt.f32.partialorder %v489, 0.0004427343
  %v491 = vsel %vm490, %v488, %v485
  %v492 = vadd.f32 %v284, 1.0
  %v493 = vlog2.pop %v492
  %v494 = vmul.f32 %v493, 0.6931472
  %v495 = vmul.f32 -0.5, %v284
  %v496 = vadd.f32 %v495, 1.0
  %v497 = vmul.f32 %v496, %v284
  %v498 = vand.u32 2147483647, %v284
  %vm499 = vcmp.lt.f32.partialorder %v498, 0.0004427343
  %v500 = vsel %vm499, %v497, %v494
  %v501 = vadd.f32 %v117, %v293
  %v502 = vadd.f32 %v118, %v302
  %v503 = vadd.f32 %v119, %v311
  %v504 = vadd.f32 %v120, %v320
  %v505 = vadd.f32 %v121, %v329
  %v506 = vadd.f32 %v122, %v338
  %v507 = vadd.f32 %v123, %v347
  %v508 = vadd.f32 %v124, %v356
  %v509 = vadd.f32 %v125, %v365
  %v510 = vadd.f32 %v126, %v374
  %v511 = vadd.f32 %v127, %v383
  %v512 = vadd.f32 %v128, %v392
  %v513 = vadd.f32 %v129, %v401
  %v514 = vadd.f32 %v130, %v410
  %v515 = vadd.f32 %v131, %v419
  %v516 = vadd.f32 %v132, %v428
  %v517 = vadd.f32 %v133, %v437
  %v518 = vadd.f32 %v134, %v446
  %v519 = vadd.f32 %v135, %v455
  %v520 = vadd.f32 %v136, %v464
  %v521 = vadd.f32 %v137, %v473
  %v522 = vadd.f32 %v138, %v482
  %v523 = vadd.f32 %v139, %v491
  %v524 = vadd.f32 %v140, %v500
  %v525 = vsel %vm141, %v165, %v501
  %v526 = vsel %vm142, %v166, %v502
  %v527 = vsel %vm143, %v167, %v503
  %v528 = vsel %vm144, %v168, %v504
  %v529 = vsel %vm145, %v169, %v505
  %v530 = vsel %vm146, %v170, %v506
  %v531 = vsel %vm147, %v171, %v507
  %v532 = vsel %vm148, %v172, %v508
  %v533 = vsel %vm149, %v173, %v509
  %v534 = vsel %vm150, %v174, %v510
  %v535 = vsel %vm151, %v175, %v511
  %v536 = vsel %vm152, %v176, %v512
  %v537 = vsel %vm153, %v177, %v513
  %v538 = vsel %vm154, %v178, %v514
  %v539 = vsel %vm155, %v179, %v515
  %v540 = vsel %vm156, %v180, %v516
  %v541 = vsel %vm157, %v181, %v517
  %v542 = vsel %vm158, %v182, %v518
  %v543 = vsel %vm159, %v183, %v519
  %v544 = vsel %vm160, %v184, %v520
  %v545 = vsel %vm161, %v185, %v521
  %v546 = vsel %vm162, %v186, %v522
  %v547 = vsel %vm163, %v187, %v523
  %v548 = vsel %vm164, %v188, %v524
  %v549 = vtanh.pop %v525
  %v550 = vtanh.pop %v526
  %v551 = vtanh.pop %v527
  %v552 = vtanh.pop %v528
  %v553 = vtanh.pop %v529
  %v554 = vtanh.pop %v530
  %v555 = vtanh.pop %v531
  %v556 = vtanh.pop %v532
  %v557 = vtanh.pop %v533
  %v558 = vtanh.pop %v534
  %v559 = vtanh.pop %v535
  %v560 = vtanh.pop %v536
  %v561 = vtanh.pop %v537
  %v562 = vtanh.pop %v538
  %v563 = vtanh.pop %v539
  %v564 = vtanh.pop %v540
  %v565 = vtanh.pop %v541
  %v566 = vtanh.pop %v542
  %v567 = vtanh.pop %v543
  %v568 = vtanh.pop %v544
  %v569 = vtanh.pop %v545
  %v570 = vtanh.pop %v546
  %v571 = vtanh.pop %v547
  %v572 = vtanh.pop %v548
  %v573 = vmul.f32 %v93, %v549
  %v574 = vmul.f32 %v94, %v550
  %v575 = vmul.f32 %v95, %v551
  %v576 = vmul.f32 %v96, %v552
  %v577 = vmul.f32 %v97, %v553
  %v578 = vmul.f32 %v98, %v554
  %v579 = vmul.f32 %v99, %v555
  %v580 = vmul.f32 %v100, %v556
  %v581 = vmul.f32 %v101, %v557
  %v582 = vmul.f32 %v102, %v558
  %v583 = vmul.f32 %v103, %v559
  %v584 = vmul.f32 %v104, %v560
  %v585 = vmul.f32 %v105, %v561
  %v586 = vmul.f32 %v106, %v562
  %v587 = vmul.f32 %v107, %v563
  %v588 = vmul.f32 %v108, %v564
  %v589 = vmul.f32 %v109, %v565
  %v590 = vmul.f32 %v110, %v566
  %v591 = vmul.f32 %v111, %v567
  %v592 = vmul.f32 %v112, %v568
  %v593 = vmul.f32 %v113, %v569
  %v594 = vmul.f32 %v114, %v570
  %v595 = vmul.f32 %v115, %v571
  %v596 = vmul.f32 %v116, %v572
  %v597 = vlaneseq
  %v598 = vand.u32 %v597, 127
  %v599 = vadd.s32 %v598, 128
  %v600 = vadd.s32 %v598, 256
  %v601 = vld [vmem:[%s3] sm:$0xff]
  %v602 = vld [vmem:[%s3 + $0x8] sm:$0xff]
  %v603 = vld [vmem:[%s3 + $0x10] sm:$0xff]
  %v604 = vld [vmem:[%s3 + $0x18] sm:$0xff]
  %v605 = vld [vmem:[%s3 + $0x20] sm:$0xff]
  %v606 = vld [vmem:[%s3 + $0x28] sm:$0xff]
  %v607 = vld [vmem:[%s3 + $0x30] sm:$0xff]
  %v608 = vld [vmem:[%s3 + $0x38] sm:$0xff]
  %v609 = vld [vmem:[%s4] sm:$0xff]
  %v610 = vld [vmem:[%s4 + $0x8] sm:$0xff]
  %v611 = vld [vmem:[%s4 + $0x10] sm:$0xff]
  %v612 = vld [vmem:[%s4 + $0x18] sm:$0xff]
  %v613 = vld [vmem:[%s4 + $0x20] sm:$0xff]
  %v614 = vld [vmem:[%s4 + $0x28] sm:$0xff]
  %v615 = vld [vmem:[%s4 + $0x30] sm:$0xff]
  %v616 = vld [vmem:[%s4 + $0x38] sm:$0xff]
  %vm617 = vcmp.lt.s32.totalorder %v598, 128
  %vm618 = vcmp.lt.s32.totalorder %v599, 128
  %vm619 = vcmp.lt.s32.totalorder %v600, 128
  %vm620 = vcmp.ge.s32.totalorder %v598, 256
  %vm621 = vcmp.ge.s32.totalorder %v599, 256
  %vm622 = vcmp.ge.s32.totalorder %v600, 256
  %v623 = vsel %vm620, 1, 0
  %v624 = vsel %vm621, 1, 0
  %v625 = vsel %vm622, 1, 0
  %vm626 = vcmp.eq.s32.totalorder %v623, 1
  %vm627 = vcmp.eq.s32.totalorder %v624, 1
  %vm628 = vcmp.eq.s32.totalorder %v625, 1
  %630 = vset.pattern.permute.xlu0 0
  %631 = vperm.xlu0 %630, %v609
  %v632 = vpop.permute.xlu0 %631
  %635 = vset.pattern.permute.xlu0 0
  %636 = vperm.xlu0 %635, %v610
  %v637 = vpop.permute.xlu0 %636
  %640 = vset.pattern.permute.xlu0 0
  %641 = vperm.xlu0 %640, %v611
  %v642 = vpop.permute.xlu0 %641
  %645 = vset.pattern.permute.xlu0 0
  %646 = vperm.xlu0 %645, %v612
  %v647 = vpop.permute.xlu0 %646
  %650 = vset.pattern.permute.xlu0 0
  %651 = vperm.xlu0 %650, %v613
  %v652 = vpop.permute.xlu0 %651
  %655 = vset.pattern.permute.xlu0 0
  %656 = vperm.xlu0 %655, %v614
  %v657 = vpop.permute.xlu0 %656
  %660 = vset.pattern.permute.xlu0 0
  %661 = vperm.xlu0 %660, %v615
  %v662 = vpop.permute.xlu0 %661
  %665 = vset.pattern.permute.xlu0 0
  %666 = vperm.xlu0 %665, %v616
  %v667 = vpop.permute.xlu0 %666
  %v669 = vsel %vm626, %v632, 1.0
  %v670 = vsel %vm627, %v632, 1.0
  %v671 = vsel %vm628, %v632, 1.0
  %v672 = vsel %vm626, %v637, 1.0
  %v673 = vsel %vm627, %v637, 1.0
  %v674 = vsel %vm628, %v637, 1.0
  %v675 = vsel %vm626, %v642, 1.0
  %v676 = vsel %vm627, %v642, 1.0
  %v677 = vsel %vm628, %v642, 1.0
  %v678 = vsel %vm626, %v647, 1.0
  %v679 = vsel %vm627, %v647, 1.0
  %v680 = vsel %vm628, %v647, 1.0
  %v681 = vsel %vm626, %v652, 1.0
  %v682 = vsel %vm627, %v652, 1.0
  %v683 = vsel %vm628, %v652, 1.0
  %v684 = vsel %vm626, %v657, 1.0
  %v685 = vsel %vm627, %v657, 1.0
  %v686 = vsel %vm628, %v657, 1.0
  %v687 = vsel %vm626, %v662, 1.0
  %v688 = vsel %vm627, %v662, 1.0
  %v689 = vsel %vm628, %v662, 1.0
  %v690 = vsel %vm626, %v667, 1.0
  %v691 = vsel %vm627, %v667, 1.0
  %v692 = vsel %vm628, %v667, 1.0
  %v693 = vsel %vm617, 1, 0
  %v694 = vsel %vm618, 1, 0
  %v695 = vsel %vm619, 1, 0
  %vm696 = vcmp.eq.s32.totalorder %v693, 1
  %vm697 = vcmp.eq.s32.totalorder %v694, 1
  %vm698 = vcmp.eq.s32.totalorder %v695, 1
  %700 = vset.pattern.permute.xlu0 0
  %701 = vperm.xlu0 %700, %v601
  %v702 = vpop.permute.xlu0 %701
  %705 = vset.pattern.permute.xlu0 0
  %706 = vperm.xlu0 %705, %v602
  %v707 = vpop.permute.xlu0 %706
  %710 = vset.pattern.permute.xlu0 0
  %711 = vperm.xlu0 %710, %v603
  %v712 = vpop.permute.xlu0 %711
  %715 = vset.pattern.permute.xlu0 0
  %716 = vperm.xlu0 %715, %v604
  %v717 = vpop.permute.xlu0 %716
  %720 = vset.pattern.permute.xlu0 0
  %721 = vperm.xlu0 %720, %v605
  %v722 = vpop.permute.xlu0 %721
  %725 = vset.pattern.permute.xlu0 0
  %726 = vperm.xlu0 %725, %v606
  %v727 = vpop.permute.xlu0 %726
  %730 = vset.pattern.permute.xlu0 0
  %731 = vperm.xlu0 %730, %v607
  %v732 = vpop.permute.xlu0 %731
  %735 = vset.pattern.permute.xlu0 0
  %736 = vperm.xlu0 %735, %v608
  %v737 = vpop.permute.xlu0 %736
  %v739 = vsel %vm696, %v702, %v669
  %v740 = vsel %vm697, %v702, %v670
  %v741 = vsel %vm698, %v702, %v671
  %v742 = vsel %vm696, %v707, %v672
  %v743 = vsel %vm697, %v707, %v673
  %v744 = vsel %vm698, %v707, %v674
  %v745 = vsel %vm696, %v712, %v675
  %v746 = vsel %vm697, %v712, %v676
  %v747 = vsel %vm698, %v712, %v677
  %v748 = vsel %vm696, %v717, %v678
  %v749 = vsel %vm697, %v717, %v679
  %v750 = vsel %vm698, %v717, %v680
  %v751 = vsel %vm696, %v722, %v681
  %v752 = vsel %vm697, %v722, %v682
  %v753 = vsel %vm698, %v722, %v683
  %v754 = vsel %vm696, %v727, %v684
  %v755 = vsel %vm697, %v727, %v685
  %v756 = vsel %vm698, %v727, %v686
  %v757 = vsel %vm696, %v732, %v687
  %v758 = vsel %vm697, %v732, %v688
  %v759 = vsel %vm698, %v732, %v689
  %v760 = vsel %vm696, %v737, %v690
  %v761 = vsel %vm697, %v737, %v691
  %v762 = vsel %vm698, %v737, %v692
  %v763 = vmul.f32 %v573, %v739
  %v764 = vmul.f32 %v574, %v740
  %v765 = vmul.f32 %v575, %v741
  %v766 = vmul.f32 %v576, %v742
  %v767 = vmul.f32 %v577, %v743
  %v768 = vmul.f32 %v578, %v744
  %v769 = vmul.f32 %v579, %v745
  %v770 = vmul.f32 %v580, %v746
  %v771 = vmul.f32 %v581, %v747
  %v772 = vmul.f32 %v582, %v748
  %v773 = vmul.f32 %v583, %v749
  %v774 = vmul.f32 %v584, %v750
  %v775 = vmul.f32 %v585, %v751
  %v776 = vmul.f32 %v586, %v752
  %v777 = vmul.f32 %v587, %v753
  %v778 = vmul.f32 %v588, %v754
  %v779 = vmul.f32 %v589, %v755
  %v780 = vmul.f32 %v590, %v756
  %v781 = vmul.f32 %v591, %v757
  %v782 = vmul.f32 %v592, %v758
  %v783 = vmul.f32 %v593, %v759
  %v784 = vmul.f32 %v594, %v760
  %v785 = vmul.f32 %v595, %v761
  %v786 = vmul.f32 %v596, %v762
  %v787 = vld [vmem:[%s1] sm:$0xff]
  %v788 = vld [vmem:[%s1 + $0x8] sm:$0xff]
  %v789 = vld [vmem:[%s1 + $0x10] sm:$0xff]
  %v790 = vld [vmem:[%s1 + $0x18] sm:$0xff]
  %v791 = vld [vmem:[%s1 + $0x20] sm:$0xff]
  %v792 = vld [vmem:[%s1 + $0x28] sm:$0xff]
  %v793 = vld [vmem:[%s1 + $0x30] sm:$0xff]
  %v794 = vld [vmem:[%s1 + $0x38] sm:$0xff]
  %v795 = vld [vmem:[%s1 + $0x40] sm:$0xff]
  %v796 = vld [vmem:[%s1 + $0x48] sm:$0xff]
  %v797 = vld [vmem:[%s1 + $0x50] sm:$0xff]
  %v798 = vld [vmem:[%s1 + $0x58] sm:$0xff]
  %v799 = vld [vmem:[%s1 + $0x60] sm:$0xff]
  %v800 = vld [vmem:[%s1 + $0x68] sm:$0xff]
  %v801 = vld [vmem:[%s1 + $0x70] sm:$0xff]
  %v802 = vld [vmem:[%s1 + $0x78] sm:$0xff]
  %v803 = vld [vmem:[%s1 + $0x80] sm:$0xff]
  %v804 = vld [vmem:[%s1 + $0x88] sm:$0xff]
  %v805 = vld [vmem:[%s1 + $0x90] sm:$0xff]
  %v806 = vld [vmem:[%s1 + $0x98] sm:$0xff]
  %v807 = vld [vmem:[%s1 + $0xa0] sm:$0xff]
  %v808 = vld [vmem:[%s1 + $0xa8] sm:$0xff]
  %v809 = vld [vmem:[%s1 + $0xb0] sm:$0xff]
  %v810 = vld [vmem:[%s1 + $0xb8] sm:$0xff]
  %v811 = vld [vmem:[%s1 + $0xc0] sm:$0xff]
  %v812 = vld [vmem:[%s1 + $0xc8] sm:$0xff]
  %v813 = vld [vmem:[%s1 + $0xd0] sm:$0xff]
  %v814 = vld [vmem:[%s1 + $0xd8] sm:$0xff]
  %v815 = vld [vmem:[%s1 + $0xe0] sm:$0xff]
  %v816 = vld [vmem:[%s1 + $0xe8] sm:$0xff]
  %v817 = vld [vmem:[%s1 + $0xf0] sm:$0xff]
  %v818 = vld [vmem:[%s1 + $0xf8] sm:$0xff]
  %v819 = vld [vmem:[%s1 + $0x100] sm:$0xff]
  %v820 = vld [vmem:[%s1 + $0x108] sm:$0xff]
  %v821 = vld [vmem:[%s1 + $0x110] sm:$0xff]
  %v822 = vld [vmem:[%s1 + $0x118] sm:$0xff]
  %v823 = vld [vmem:[%s1 + $0x120] sm:$0xff]
  %v824 = vld [vmem:[%s1 + $0x128] sm:$0xff]
  %v825 = vld [vmem:[%s1 + $0x130] sm:$0xff]
  %v826 = vld [vmem:[%s1 + $0x138] sm:$0xff]
  %v827 = vld [vmem:[%s1 + $0x140] sm:$0xff]
  %v828 = vld [vmem:[%s1 + $0x148] sm:$0xff]
  %v829 = vld [vmem:[%s1 + $0x150] sm:$0xff]
  %v830 = vld [vmem:[%s1 + $0x158] sm:$0xff]
  %v831 = vld [vmem:[%s1 + $0x160] sm:$0xff]
  %v832 = vld [vmem:[%s1 + $0x168] sm:$0xff]
  %v833 = vld [vmem:[%s1 + $0x170] sm:$0xff]
  %v834 = vld [vmem:[%s1 + $0x178] sm:$0xff]
  %v835 = vld [vmem:[%s2] sm:$0x1]
  %v837 = vperm.slane %v835, 0
  %839 = vmatpush.msra.mxu0 %v802
  %840 = vmatpush.msra.mxu0 %v801
  %841 = vmatpush.msra.mxu0 %v800
  %842 = vmatpush.msra.mxu0 %v799
  %843 = vmatpush.msra.mxu0 %v798
  %844 = vmatpush.msra.mxu0 %v797
  %845 = vmatpush.msra.mxu0 %v796
  %846 = vmatpush.msra.mxu0 %v795
  %847 = vmatpush.msra.mxu0 %v794
  %848 = vmatpush.msra.mxu0 %v793
  %849 = vmatpush.msra.mxu0 %v792
  %850 = vmatpush.msra.mxu0 %v791
  %851 = vmatpush.msra.mxu0 %v790
  %852 = vmatpush.msra.mxu0 %v789
  %853 = vmatpush.msra.mxu0 %v788
  %854 = vmatpush.msra.mxu0 %v787
  %855 = vmatmul.f32.gmra.mxu0 %v763
  %v856 = vpop.f32.mrf.mxu0
  %v857 = vadd.f32 %v837, %v856
  %858 = vmatmul.f32.gmra.mxu0 %v766
  %v859 = vpop.f32.mrf.mxu0
  %v860 = vadd.f32 %v837, %v859
  %861 = vmatmul.f32.gmra.mxu0 %v769
  %v862 = vpop.f32.mrf.mxu0
  %v863 = vadd.f32 %v837, %v862
  %864 = vmatmul.f32.gmra.mxu0 %v772
  %v865 = vpop.f32.mrf.mxu0
  %v866 = vadd.f32 %v837, %v865
  %867 = vmatmul.f32.gmra.mxu0 %v775
  %v868 = vpop.f32.mrf.mxu0
  %v869 = vadd.f32 %v837, %v868
  %870 = vmatmul.f32.gmra.mxu0 %v778
  %v871 = vpop.f32.mrf.mxu0
  %v872 = vadd.f32 %v837, %v871
  %873 = vmatmul.f32.gmra.mxu0 %v781
  %v874 = vpop.f32.mrf.mxu0
  %v875 = vadd.f32 %v837, %v874
  %876 = vmatmul.f32.gmra.mxu0 %v784
  %v877 = vpop.f32.mrf.mxu0
  %v878 = vadd.f32 %v837, %v877
  %879 = vdwg.mxu0
  %880 = vmatpush.msra.mxu0 %v818
  %881 = vmatpush.msra.mxu0 %v817
  %882 = vmatpush.msra.mxu0 %v816
  %883 = vmatpush.msra.mxu0 %v815
  %884 = vmatpush.msra.mxu0 %v814
  %885 = vmatpush.msra.mxu0 %v813
  %886 = vmatpush.msra.mxu0 %v812
  %887 = vmatpush.msra.mxu0 %v811
  %888 = vmatpush.msra.mxu0 %v810
  %889 = vmatpush.msra.mxu0 %v809
  %890 = vmatpush.msra.mxu0 %v808
  %891 = vmatpush.msra.mxu0 %v807
  %892 = vmatpush.msra.mxu0 %v806
  %893 = vmatpush.msra.mxu0 %v805
  %894 = vmatpush.msra.mxu0 %v804
  %895 = vmatpush.msra.mxu0 %v803
  %896 = vmatmul.f32.gmra.mxu0 %v764
  %v897 = vpop.f32.mrf.mxu0
  %v898 = vadd.f32 %v857, %v897
  %899 = vmatmul.f32.gmra.mxu0 %v767
  %v900 = vpop.f32.mrf.mxu0
  %v901 = vadd.f32 %v860, %v900
  %902 = vmatmul.f32.gmra.mxu0 %v770
  %v903 = vpop.f32.mrf.mxu0
  %v904 = vadd.f32 %v863, %v903
  %905 = vmatmul.f32.gmra.mxu0 %v773
  %v906 = vpop.f32.mrf.mxu0
  %v907 = vadd.f32 %v866, %v906
  %908 = vmatmul.f32.gmra.mxu0 %v776
  %v909 = vpop.f32.mrf.mxu0
  %v910 = vadd.f32 %v869, %v909
  %911 = vmatmul.f32.gmra.mxu0 %v779
  %v912 = vpop.f32.mrf.mxu0
  %v913 = vadd.f32 %v872, %v912
  %914 = vmatmul.f32.gmra.mxu0 %v782
  %v915 = vpop.f32.mrf.mxu0
  %v916 = vadd.f32 %v875, %v915
  %917 = vmatmul.f32.gmra.mxu0 %v785
  %v918 = vpop.f32.mrf.mxu0
  %v919 = vadd.f32 %v878, %v918
  %920 = vdwg.mxu0
  %921 = vmatpush.msra.mxu0 %v834
  %922 = vmatpush.msra.mxu0 %v833
  %923 = vmatpush.msra.mxu0 %v832
  %924 = vmatpush.msra.mxu0 %v831
  %925 = vmatpush.msra.mxu0 %v830
  %926 = vmatpush.msra.mxu0 %v829
  %927 = vmatpush.msra.mxu0 %v828
  %928 = vmatpush.msra.mxu0 %v827
  %929 = vmatpush.msra.mxu0 %v826
  %930 = vmatpush.msra.mxu0 %v825
  %931 = vmatpush.msra.mxu0 %v824
  %932 = vmatpush.msra.mxu0 %v823
  %933 = vmatpush.msra.mxu0 %v822
  %934 = vmatpush.msra.mxu0 %v821
  %935 = vmatpush.msra.mxu0 %v820
  %936 = vmatpush.msra.mxu0 %v819
  %937 = vmatmul.f32.gmra.mxu0 %v765
  %v938 = vpop.f32.mrf.mxu0
  %v939 = vadd.f32 %v898, %v938
  %940 = vmatmul.f32.gmra.mxu0 %v768
  %v941 = vpop.f32.mrf.mxu0
  %v942 = vadd.f32 %v901, %v941
  %943 = vmatmul.f32.gmra.mxu0 %v771
  %v944 = vpop.f32.mrf.mxu0
  %v945 = vadd.f32 %v904, %v944
  %946 = vmatmul.f32.gmra.mxu0 %v774
  %v947 = vpop.f32.mrf.mxu0
  %v948 = vadd.f32 %v907, %v947
  %949 = vmatmul.f32.gmra.mxu0 %v777
  %v950 = vpop.f32.mrf.mxu0
  %v951 = vadd.f32 %v910, %v950
  %952 = vmatmul.f32.gmra.mxu0 %v780
  %v953 = vpop.f32.mrf.mxu0
  %v954 = vadd.f32 %v913, %v953
  %955 = vmatmul.f32.gmra.mxu0 %v783
  %v956 = vpop.f32.mrf.mxu0
  %v957 = vadd.f32 %v916, %v956
  %958 = vmatmul.f32.gmra.mxu0 %v786
  %v959 = vpop.f32.mrf.mxu0
  %v960 = vadd.f32 %v919, %v959
  %961 = vdwg.mxu0
  %962 = vst [vmem:[%s7] sm:$0xff] %v939
  %963 = vst [vmem:[%s7 + $0x8] sm:$0xff] %v942
  %964 = vst [vmem:[%s7 + $0x10] sm:$0xff] %v945
  %965 = vst [vmem:[%s7 + $0x18] sm:$0xff] %v948
  %966 = vst [vmem:[%s7 + $0x20] sm:$0xff] %v951
  %967 = vst [vmem:[%s7 + $0x28] sm:$0xff] %v954
  %968 = vst [vmem:[%s7 + $0x30] sm:$0xff] %v957
  %969 = vst [vmem:[%s7 + $0x38] sm:$0xff] %v960
  %v970 = vadd.f32 %v939, %v942
  %v971 = vadd.f32 %v970, %v945
  %v972 = vadd.f32 %v971, %v948
  %v973 = vadd.f32 %v972, %v951
  %v974 = vadd.f32 %v973, %v954
  %v975 = vadd.f32 %v974, %v957
  %v976 = vadd.f32 %v975, %v960
  %v977 = vrot.slane %v976, 4
  %v978 = vadd.f32 %v976, %v977
  %v979 = vrot.slane %v978, 2
  %v980 = vadd.f32 %v978, %v979
  %v981 = vrot.slane %v980, 1
  %v982 = vadd.f32 %v980, %v981
  %v983 = vmul.f32 %v939, %v939
  %v984 = vmul.f32 %v942, %v942
  %v985 = vmul.f32 %v945, %v945
  %v986 = vmul.f32 %v948, %v948
  %v987 = vmul.f32 %v951, %v951
  %v988 = vmul.f32 %v954, %v954
  %v989 = vmul.f32 %v957, %v957
  %v990 = vmul.f32 %v960, %v960
  %v991 = vadd.f32 %v983, %v984
  %v992 = vadd.f32 %v991, %v985
  %v993 = vadd.f32 %v992, %v986
  %v994 = vadd.f32 %v993, %v987
  %v995 = vadd.f32 %v994, %v988
  %v996 = vadd.f32 %v995, %v989
  %v997 = vadd.f32 %v996, %v990
  %v998 = vrot.slane %v997, 4
  %v999 = vadd.f32 %v997, %v998
  %v1000 = vrot.slane %v999, 2
  %v1001 = vadd.f32 %v999, %v1000
  %v1002 = vrot.slane %v1001, 1
  %v1003 = vadd.f32 %v1001, %v1002
  %p1004 = scmp.eq.s32.totalorder 0, 0
  // Predicated region
  $region30: #{decoder_forward.4} parent=0 // pred_check
    %p1005 = pneg %p1004
  $region31: #{decoder_forward.4} parent=0 // pred_check_branch
    %1007 = sbr.rel (%p1005) target = $region33
  $region32: #{decoder_forward.4} parent=0 // pred_region
    %1008 = vst [vmem:[%s8] sm:$0x1] 0.0
    %1009 = vst [vmem:[%s9] sm:$0x1] 0.0
  $region33: #{decoder_forward.4} parent=0 // pred_fallthru
    _
  %v1010 = vld [vmem:[%s8] sm:$0x1]
  %v1011 = vadd.f32 %v1010, %v982
  %1012 = vst [vmem:[%s8] sm:$0x1] %v1011
  %v1013 = vld [vmem:[%s9] sm:$0x1]
  %v1014 = vadd.f32 %v1013, %v1003
  %1015 = vst [vmem:[%s9] sm:$0x1] %v1014
  // Predicated region
  $region34: #{decoder_forward.4} parent=0 // pred_check
    _
  $region35: #{decoder_forward.4} parent=0 // pred_check_branch
    %1017 = sbr.rel (0) target = $region37
  $region36: #{decoder_forward.4} parent=0 // pred_region
    _
  $region37: #{decoder_forward.4} parent=0 // pred_fallthru
    _
  // Predicated region
  $region38: #{decoder_forward.4} parent=0 // pred_check
    _
  $region39: #{decoder_forward.4} parent=0 // pred_check_branch
    %1019 = sbr.rel (0) target = $region41
  $region40: #{decoder_forward.4} parent=0 // pred_region
    _
  $region41: #{decoder_forward.4} parent=0 // pred_fallthru
    _
  // Predicated region
  $region42: #{decoder_forward.4} parent=0 // pred_check
    _
  $region43: #{decoder_forward.4} parent=0 // pred_check_branch
    %1021 = sbr.rel (0) target = $region45
  $region44: #{decoder_forward.4} parent=0 // pred_region
    _
  $region45: #{decoder_forward.4} parent=0 // pred_fallthru
    _
  // Predicated region
  $region46: #{decoder_forward.4} parent=0 // pred_check
    _
  $region47: #{decoder_forward.4} parent=0 // pred_check_branch
    %1023 = sbr.rel (0) target = $region49
  $region48: #{decoder_forward.4} parent=0 // pred_region
    _
  $region49: #{decoder_forward.4} parent=0 // pred_fallthru
    _
  // Predicated region
  $region50: #{decoder_forward.4} parent=0 // pred_check
    _
  $region51: #{decoder_forward.4} parent=0 // pred_check_branch
    %1025 = sbr.rel (0) target = $region53
  $region52: #{decoder_forward.4} parent=0 // pred_region
    _
  $region53: #{decoder_forward.4} parent=0 // pred_fallthru
    _
  // Predicated region
  $region54: #{decoder_forward.4} parent=0 // pred_check
    _
  $region55: #{decoder_forward.4} parent=0 // pred_check_branch
    %1027 = sbr.rel (0) target = $region57
  $region56: #{decoder_forward.4} parent=0 // pred_region
    _
  $region57: #{decoder_forward.4} parent=0 // pred_fallthru
    _

</llo_original>
